<compile_context>
chip_gen: v7x
topology: tpu7x:2x2x1
jax: 0.10.0
libtpu: 0.0.40
codegen_flags: <defaults>
</compile_context>

<pallas_src>
import functools

import jax
import jax.numpy as jnp
from jax.experimental import pallas as pl
from jax.experimental.pallas import tpu as pltpu


def _lstm_cell(gates, h, c, m, H):
    """One LSTM cell update.  gates: (B, 4H) pre-activations (i,f,g,o order),
    h/c: (B, H) previous state, m: (B, 1) float {0,1} validity mask."""
    i_g = jax.nn.sigmoid(gates[:, 0 * H:1 * H])
    f_g = jax.nn.sigmoid(gates[:, 1 * H:2 * H])
    g_g = jnp.tanh(gates[:, 2 * H:3 * H])
    o_g = jax.nn.sigmoid(gates[:, 3 * H:4 * H])
    c_new = f_g * c + i_g * g_g
    h_new = o_g * jnp.tanh(c_new)
    # masked update: frozen state + zeroed output at padded positions
    h_out = h + m * (h_new - h)
    c_out = c + m * (c_new - c)
    return h_out, c_out, m * h_new


def _bilstm_kernel(gf_ref, gb_ref, mf_ref, mb_ref, whhf_ref, whhb_ref,
                   of_ref, ob_ref,
                   hf_ref, cf_ref, hb_ref, cb_ref, *, ts, hidden):
    """Fused bidirectional LSTM over one TS-sized block of timesteps.

    gf_ref/mf_ref: forward-time block (TS, B, 4H) / (TS, B, 1)
    gb_ref/mb_ref: reverse-time  block (TS, B, 4H) / (TS, B, 1)
    whh*_ref:      recurrent weights (H, 4H), VMEM resident
    of_ref/ob_ref: per-direction outputs (TS, B, H)
    h*/c* scratch: carried (B, H) states for both directions
    """
    H = hidden

    @pl.when(pl.program_id(0) == 0)
    def _():
        hf_ref[...] = jnp.zeros_like(hf_ref)
        cf_ref[...] = jnp.zeros_like(cf_ref)
        hb_ref[...] = jnp.zeros_like(hb_ref)
        cb_ref[...] = jnp.zeros_like(cb_ref)

    # Load resident weights once per grid step (hoisted out of the time loop).
    whh_f = whhf_ref[...]
    whh_b = whhb_ref[...]

    h_f, c_f = hf_ref[...], cf_ref[...]
    h_b, c_b = hb_ref[...], cb_ref[...]

    # Fully unrolled inner time loop (ts is a small static constant) so the
    # scheduler sees the whole block; all ref indices are static.
    for s in range(ts):
        sb = ts - 1 - s                      # reverse direction walks backwards
        gates_f = gf_ref[s] + jnp.dot(h_f, whh_f,
                                      preferred_element_type=jnp.float32)
        gates_b = gb_ref[sb] + jnp.dot(h_b, whh_b,
                                       preferred_element_type=jnp.float32)
        h_f, c_f, o_f = _lstm_cell(gates_f, h_f, c_f, mf_ref[s], H)
        h_b, c_b, o_b = _lstm_cell(gates_b, h_b, c_b, mb_ref[sb], H)
        of_ref[s] = o_f
        ob_ref[sb] = o_b

    hf_ref[...] = h_f
    cf_ref[...] = c_f
    hb_ref[...] = h_b
    cb_ref[...] = c_b


def my_lstm_forward(x, seq_sizes, params, *, ts_max=16):
    """JAX/Pallas equivalent of myLSTM.forward.

    x:         (seq_len, batch, feature_len) float32, feature_len = input_size // 2
    seq_sizes: python list of ints (lengths AFTER halving)
    returns:   (max(seq_sizes), batch, 2 * hidden_size) float32
    """
    seq_len, batch, feat = x.shape
    new_len = seq_len // 2

    # pyramidal reshape: concat pairs of consecutive timesteps along feature dim
    x = x[:2 * new_len]
    x = jnp.transpose(x, (1, 0, 2)).reshape(batch, new_len, 2 * feat)
    x = jnp.transpose(x, (1, 0, 2))                       # (new_len, B, 2*feat)

    max_len = int(max(seq_sizes))
    assert max_len <= new_len, "sequence length exceeds halved time dimension"
    x = x[:max_len]                                       # (T, B, F)

    T, B, F = x.shape
    H = params["w_hh_f"].shape[0]
    G = 4 * H

    # --- (1) hoisted input projection for BOTH directions in one matmul -----
    w_ih_all = jnp.concatenate([params["w_ih_f"], params["w_ih_b"]], axis=1)  # (F, 8H)
    b_all = jnp.concatenate([params["b_f"], params["b_b"]], axis=1)           # (1, 8H)
    gates_all = (x.reshape(T * B, F) @ w_ih_all).reshape(T, B, 2 * G) + b_all

    # --- (3) block TS timesteps per grid step; pad T to a multiple of TS ----
    ts = min(ts_max, T)
    nb = pl.cdiv(T, ts)
    t_pad = nb * ts
    if t_pad != T:
        gates_all = jnp.pad(gates_all, ((0, t_pad - T), (0, 0), (0, 0)))
    gates_f = gates_all[..., :G]
    gates_b = gates_all[..., G:]

    # --- (4) precomputed validity mask (replaces in-kernel length compares) -
    lengths = jnp.asarray(seq_sizes, jnp.int32)
    mask = (jnp.arange(t_pad, dtype=jnp.int32)[:, None]
            < lengths[None, :]).astype(jnp.float32)[..., None]   # (T_pad, B, 1)

    fwd = lambda i: (i, 0, 0)
    bwd = lambda i: (nb - 1 - i, 0, 0)
    const2 = lambda i: (0, 0)

    kernel = functools.partial(_bilstm_kernel, ts=ts, hidden=H)

    out_f, out_b = pl.pallas_call(
        kernel,
        out_shape=(jax.ShapeDtypeStruct((t_pad, B, H), jnp.float32),
                   jax.ShapeDtypeStruct((t_pad, B, H), jnp.float32)),
        grid=(nb,),
        in_specs=[
            pl.BlockSpec((ts, B, G), fwd),       # forward gate pre-activations
            pl.BlockSpec((ts, B, G), bwd),       # backward gate pre-activations
            pl.BlockSpec((ts, B, 1), fwd),       # forward mask
            pl.BlockSpec((ts, B, 1), bwd),       # backward mask
            pl.BlockSpec((H, G), const2),        # W_hh forward (VMEM resident)
            pl.BlockSpec((H, G), const2),        # W_hh backward (VMEM resident)
        ],
        out_specs=(pl.BlockSpec((ts, B, H), fwd),
                   pl.BlockSpec((ts, B, H), bwd)),
        scratch_shapes=[pltpu.VMEM((B, H), jnp.float32)] * 4,   # h_f, c_f, h_b, c_b
        compiler_params=pltpu.CompilerParams(
            dimension_semantics=("arbitrary",)),   # sequential recurrence
    )(gates_f, gates_b, mask, mask, params["w_hh_f"], params["w_hh_b"])

    # TODO(synk): final (h_n, c_n) states are not returned (the PyTorch module
    # discards them as well).
    return jnp.concatenate([out_f[:max_len], out_b[:max_len]], axis=-1)


def init_params(key, input_size, hidden_size):
    """Deterministic synthetic LSTM parameters (PyTorch gate order i,f,g,o).

    Weights are stored transposed (in_dim, 4H) so the kernel computes x @ W.
    The two PyTorch biases (b_ih + b_hh) are pre-summed.
    """
    F, H = input_size, hidden_size
    ks = jax.random.split(key, 8)
    u = lambda k, shp: jax.random.uniform(k, shp, jnp.float32, -0.1, 0.1)
    return {
        "w_ih_f": u(ks[0], (F, 4 * H)),
        "w_hh_f": u(ks[1], (H, 4 * H)),
        "b_f":    u(ks[2], (1, 4 * H)) + u(ks[3], (1, 4 * H)),
        "w_ih_b": u(ks[4], (F, 4 * H)),
        "w_hh_b": u(ks[5], (H, 4 * H)),
        "b_b":    u(ks[6], (1, 4 * H)) + u(ks[7], (1, 4 * H)),
    }


if __name__ == "__main__":
    # module config: input_size = 16 (LSTM input), hidden_size = 32
    # so the raw x feature_len must be input_size // 2 = 8
    input_size, hidden_size = 16, 32
    seq_len, batch, feat = 8, 2, input_size // 2
    new_len = seq_len // 2
    # lengths after halving, sorted descending (pack_padded_sequence default)
    seq_sizes = [new_len, new_len - 1]

    key = jax.random.PRNGKey(0)
    kx, kp = jax.random.split(key)
    x = jax.random.normal(kx, (seq_len, batch, feat), jnp.float32)
    params = init_params(kp, input_size, hidden_size)

    out = my_lstm_forward(x, seq_sizes, params)
    out = jax.block_until_ready(out)
    assert out.shape == (max(seq_sizes), batch, 2 * hidden_size), out.shape
    print("KERNEL_OK")
</pallas_src>

<mosaic_0001>
module attributes {stable_mosaic.version = 11 : i64} {
  func.func @_bilstm_kernel(%arg0: i32, %arg1: memref<4x2x128xf32, #tpu.memory_space<vmem>>, %arg2: memref<4x2x128xf32, #tpu.memory_space<vmem>>, %arg3: memref<4x2x1xf32, #tpu.memory_space<vmem>>, %arg4: memref<4x2x1xf32, #tpu.memory_space<vmem>>, %arg5: memref<32x128xf32, #tpu.memory_space<vmem>>, %arg6: memref<32x128xf32, #tpu.memory_space<vmem>>, %arg7: memref<4x2x32xf32, #tpu.memory_space<vmem>>, %arg8: memref<4x2x32xf32, #tpu.memory_space<vmem>>, %arg9: memref<2x32xf32, #tpu.memory_space<vmem>>, %arg10: memref<2x32xf32, #tpu.memory_space<vmem>>, %arg11: memref<2x32xf32, #tpu.memory_space<vmem>>, %arg12: memref<2x32xf32, #tpu.memory_space<vmem>>) attributes {dimension_semantics = [#tpu.dimension_semantics<arbitrary>], iteration_bounds = array<i64: 1>, scalar_prefetch = 0 : i64, scratch_operands = 4 : i64, tpu.core_type = #tpu.core_type<tc>, window_params = [{transform_indices = @transform_0, window_bounds = array<i64: 4, 2, 128>}, {transform_indices = @transform_1, window_bounds = array<i64: 4, 2, 128>}, {transform_indices = @transform_2, window_bounds = array<i64: 4, 2, 1>}, {transform_indices = @transform_3, window_bounds = array<i64: 4, 2, 1>}, {pipeline_mode = #tpu.pipeline_mode<synchronous>, transform_indices = @transform_4, window_bounds = array<i64: 32, 128>}, {pipeline_mode = #tpu.pipeline_mode<synchronous>, transform_indices = @transform_5, window_bounds = array<i64: 32, 128>}, {transform_indices = @transform_6, window_bounds = array<i64: 4, 2, 32>}, {transform_indices = @transform_7, window_bounds = array<i64: 4, 2, 32>}]} {
    %c0_i32 = arith.constant 0 : i32
    %0 = arith.cmpi eq, %arg0, %c0_i32 : i32
    %1 = arith.extui %0 : i1 to i32
    %c0_i32_0 = arith.constant 0 : i32
    %2 = arith.cmpi ne, %1, %c0_i32_0 : i32
    scf.if %2 {
      %cst_120 = arith.constant 0.000000e+00 : f32
      %365 = vector.broadcast %cst_120 : f32 to vector<2x32xf32>
      %c0_121 = arith.constant 0 : index
      %c0_122 = arith.constant 0 : index
      %366 = vector.load %arg9[%c0_121, %c0_122] : memref<2x32xf32, #tpu.memory_space<vmem>>, vector<2x32xf32>
      tpu.vector_store %arg9[%c0_121, %c0_122], %365 {strides = array<i32>} : memref<2x32xf32, #tpu.memory_space<vmem>>, vector<2x32xf32>,
      %cst_123 = arith.constant 0.000000e+00 : f32
      %367 = vector.broadcast %cst_123 : f32 to vector<2x32xf32>
      %c0_124 = arith.constant 0 : index
      %c0_125 = arith.constant 0 : index
      %368 = vector.load %arg10[%c0_124, %c0_125] : memref<2x32xf32, #tpu.memory_space<vmem>>, vector<2x32xf32>
      tpu.vector_store %arg10[%c0_124, %c0_125], %367 {strides = array<i32>} : memref<2x32xf32, #tpu.memory_space<vmem>>, vector<2x32xf32>,
      %cst_126 = arith.constant 0.000000e+00 : f32
      %369 = vector.broadcast %cst_126 : f32 to vector<2x32xf32>
      %c0_127 = arith.constant 0 : index
      %c0_128 = arith.constant 0 : index
      %370 = vector.load %arg11[%c0_127, %c0_128] : memref<2x32xf32, #tpu.memory_space<vmem>>, vector<2x32xf32>
      tpu.vector_store %arg11[%c0_127, %c0_128], %369 {strides = array<i32>} : memref<2x32xf32, #tpu.memory_space<vmem>>, vector<2x32xf32>,
      %cst_129 = arith.constant 0.000000e+00 : f32
      %371 = vector.broadcast %cst_129 : f32 to vector<2x32xf32>
      %c0_130 = arith.constant 0 : index
      %c0_131 = arith.constant 0 : index
      %372 = vector.load %arg12[%c0_130, %c0_131] : memref<2x32xf32, #tpu.memory_space<vmem>>, vector<2x32xf32>
      tpu.vector_store %arg12[%c0_130, %c0_131], %371 {strides = array<i32>} : memref<2x32xf32, #tpu.memory_space<vmem>>, vector<2x32xf32>,
    } else {
    }
    %c0 = arith.constant 0 : index
    %c0_1 = arith.constant 0 : index
    %3 = vector.load %arg5[%c0, %c0_1] : memref<32x128xf32, #tpu.memory_space<vmem>>, vector<32x128xf32>
    %c0_2 = arith.constant 0 : index
    %c0_3 = arith.constant 0 : index
    %4 = vector.load %arg6[%c0_2, %c0_3] : memref<32x128xf32, #tpu.memory_space<vmem>>, vector<32x128xf32>
    %c0_4 = arith.constant 0 : index
    %c0_5 = arith.constant 0 : index
    %5 = vector.load %arg9[%c0_4, %c0_5] : memref<2x32xf32, #tpu.memory_space<vmem>>, vector<2x32xf32>
    %c0_6 = arith.constant 0 : index
    %c0_7 = arith.constant 0 : index
    %6 = vector.load %arg10[%c0_6, %c0_7] : memref<2x32xf32, #tpu.memory_space<vmem>>, vector<2x32xf32>
    %c0_8 = arith.constant 0 : index
    %c0_9 = arith.constant 0 : index
    %7 = vector.load %arg11[%c0_8, %c0_9] : memref<2x32xf32, #tpu.memory_space<vmem>>, vector<2x32xf32>
    %c0_10 = arith.constant 0 : index
    %c0_11 = arith.constant 0 : index
    %8 = vector.load %arg12[%c0_10, %c0_11] : memref<2x32xf32, #tpu.memory_space<vmem>>, vector<2x32xf32>
    %c0_12 = arith.constant 0 : index
    %c0_13 = arith.constant 0 : index
    %c0_14 = arith.constant 0 : index
    %9 = vector.load %arg1[%c0_12, %c0_13, %c0_14] : memref<4x2x128xf32, #tpu.memory_space<vmem>>, vector<1x2x128xf32>
    %10 = vector.shape_cast %9 : vector<1x2x128xf32> to vector<2x128xf32>
    %cst = arith.constant dense<0.000000e+00> : vector<2x128xf32>
    %11 = tpu.matmul %5, %3, %cst {dimension_numbers = #tpu.dot_dimension_numbers<[1], [0], [0], [1], [0, 0, 1, 1], [], []>} : vector<2x32xf32>, vector<32x128xf32>, vector<2x128xf32> -> vector<2x128xf32>
    %12 = arith.addf %10, %11 : vector<2x128xf32>
    %c3 = arith.constant 3 : index
    %c0_15 = arith.constant 0 : index
    %c0_16 = arith.constant 0 : index
    %13 = vector.load %arg2[%c3, %c0_15, %c0_16] : memref<4x2x128xf32, #tpu.memory_space<vmem>>, vector<1x2x128xf32>
    %14 = vector.shape_cast %13 : vector<1x2x128xf32> to vector<2x128xf32>
    %cst_17 = arith.constant dense<0.000000e+00> : vector<2x128xf32>
    %15 = tpu.matmul %7, %4, %cst_17 {dimension_numbers = #tpu.dot_dimension_numbers<[1], [0], [0], [1], [0, 0, 1, 1], [], []>} : vector<2x32xf32>, vector<32x128xf32>, vector<2x128xf32> -> vector<2x128xf32>
    %16 = arith.addf %14, %15 : vector<2x128xf32>
    %c0_18 = arith.constant 0 : index
    %c0_19 = arith.constant 0 : index
    %c0_20 = arith.constant 0 : index
    %17 = vector.load %arg3[%c0_18, %c0_19, %c0_20] : memref<4x2x1xf32, #tpu.memory_space<vmem>>, vector<1x2x1xf32>
    %18 = vector.shape_cast %17 : vector<1x2x1xf32> to vector<2x1xf32>
    %19 = vector.extract_strided_slice %12 {offsets = [0, 0], sizes = [2, 32], strides = [1, 1]} : vector<2x128xf32> to vector<2x32xf32>
    %20 = arith.negf %19 : vector<2x32xf32>
    %21 = math.exp %20 : vector<2x32xf32>
    %cst_21 = arith.constant 1.000000e+00 : f32
    %22 = vector.broadcast %cst_21 : f32 to vector<2x32xf32>
    %23 = arith.addf %22, %21 : vector<2x32xf32>
    %24 = arith.divf %22, %23 : vector<2x32xf32>
    %25 = vector.extract_strided_slice %12 {offsets = [0, 32], sizes = [2, 32], strides = [1, 1]} : vector<2x128xf32> to vector<2x32xf32>
    %26 = arith.negf %25 : vector<2x32xf32>
    %27 = math.exp %26 : vector<2x32xf32>
    %cst_22 = arith.constant 1.000000e+00 : f32
    %28 = vector.broadcast %cst_22 : f32 to vector<2x32xf32>
    %29 = arith.addf %28, %27 : vector<2x32xf32>
    %30 = arith.divf %28, %29 : vector<2x32xf32>
    %31 = vector.extract_strided_slice %12 {offsets = [0, 64], sizes = [2, 32], strides = [1, 1]} : vector<2x128xf32> to vector<2x32xf32>
    %32 = math.tanh %31 : vector<2x32xf32>
    %33 = vector.extract_strided_slice %12 {offsets = [0, 96], sizes = [2, 32], strides = [1, 1]} : vector<2x128xf32> to vector<2x32xf32>
    %34 = arith.negf %33 : vector<2x32xf32>
    %35 = math.exp %34 : vector<2x32xf32>
    %cst_23 = arith.constant 1.000000e+00 : f32
    %36 = vector.broadcast %cst_23 : f32 to vector<2x32xf32>
    %37 = arith.addf %36, %35 : vector<2x32xf32>
    %38 = arith.divf %36, %37 : vector<2x32xf32>
    %39 = arith.mulf %30, %6 : vector<2x32xf32>
    %40 = arith.mulf %24, %32 : vector<2x32xf32>
    %41 = arith.addf %39, %40 : vector<2x32xf32>
    %42 = math.tanh %41 : vector<2x32xf32>
    %43 = arith.mulf %38, %42 : vector<2x32xf32>
    %44 = arith.subf %43, %5 : vector<2x32xf32>
    %45 = vector.broadcast %18 : vector<2x1xf32> to vector<2x32xf32>
    %46 = arith.mulf %45, %44 : vector<2x32xf32>
    %47 = arith.addf %5, %46 : vector<2x32xf32>
    %48 = arith.subf %41, %6 : vector<2x32xf32>
    %49 = vector.broadcast %18 : vector<2x1xf32> to vector<2x32xf32>
    %50 = arith.mulf %49, %48 : vector<2x32xf32>
    %51 = arith.addf %6, %50 : vector<2x32xf32>
    %52 = vector.broadcast %18 : vector<2x1xf32> to vector<2x32xf32>
    %53 = arith.mulf %52, %43 : vector<2x32xf32>
    %c3_24 = arith.constant 3 : index
    %c0_25 = arith.constant 0 : index
    %c0_26 = arith.constant 0 : index
    %54 = vector.load %arg4[%c3_24, %c0_25, %c0_26] : memref<4x2x1xf32, #tpu.memory_space<vmem>>, vector<1x2x1xf32>
    %55 = vector.shape_cast %54 : vector<1x2x1xf32> to vector<2x1xf32>
    %56 = vector.extract_strided_slice %16 {offsets = [0, 0], sizes = [2, 32], strides = [1, 1]} : vector<2x128xf32> to vector<2x32xf32>
    %57 = arith.negf %56 : vector<2x32xf32>
    %58 = math.exp %57 : vector<2x32xf32>
    %cst_27 = arith.constant 1.000000e+00 : f32
    %59 = vector.broadcast %cst_27 : f32 to vector<2x32xf32>
    %60 = arith.addf %59, %58 : vector<2x32xf32>
    %61 = arith.divf %59, %60 : vector<2x32xf32>
    %62 = vector.extract_strided_slice %16 {offsets = [0, 32], sizes = [2, 32], strides = [1, 1]} : vector<2x128xf32> to vector<2x32xf32>
    %63 = arith.negf %62 : vector<2x32xf32>
    %64 = math.exp %63 : vector<2x32xf32>
    %cst_28 = arith.constant 1.000000e+00 : f32
    %65 = vector.broadcast %cst_28 : f32 to vector<2x32xf32>
    %66 = arith.addf %65, %64 : vector<2x32xf32>
    %67 = arith.divf %65, %66 : vector<2x32xf32>
    %68 = vector.extract_strided_slice %16 {offsets = [0, 64], sizes = [2, 32], strides = [1, 1]} : vector<2x128xf32> to vector<2x32xf32>
    %69 = math.tanh %68 : vector<2x32xf32>
    %70 = vector.extract_strided_slice %16 {offsets = [0, 96], sizes = [2, 32], strides = [1, 1]} : vector<2x128xf32> to vector<2x32xf32>
    %71 = arith.negf %70 : vector<2x32xf32>
    %72 = math.exp %71 : vector<2x32xf32>
    %cst_29 = arith.constant 1.000000e+00 : f32
    %73 = vector.broadcast %cst_29 : f32 to vector<2x32xf32>
    %74 = arith.addf %73, %72 : vector<2x32xf32>
    %75 = arith.divf %73, %74 : vector<2x32xf32>
    %76 = arith.mulf %67, %8 : vector<2x32xf32>
    %77 = arith.mulf %61, %69 : vector<2x32xf32>
    %78 = arith.addf %76, %77 : vector<2x32xf32>
    %79 = math.tanh %78 : vector<2x32xf32>
    %80 = arith.mulf %75, %79 : vector<2x32xf32>
    %81 = arith.subf %80, %7 : vector<2x32xf32>
    %82 = vector.broadcast %55 : vector<2x1xf32> to vector<2x32xf32>
    %83 = arith.mulf %82, %81 : vector<2x32xf32>
    %84 = arith.addf %7, %83 : vector<2x32xf32>
    %85 = arith.subf %78, %8 : vector<2x32xf32>
    %86 = vector.broadcast %55 : vector<2x1xf32> to vector<2x32xf32>
    %87 = arith.mulf %86, %85 : vector<2x32xf32>
    %88 = arith.addf %8, %87 : vector<2x32xf32>
    %89 = vector.broadcast %55 : vector<2x1xf32> to vector<2x32xf32>
    %90 = arith.mulf %89, %80 : vector<2x32xf32>
    %c0_30 = arith.constant 0 : index
    %c0_31 = arith.constant 0 : index
    %c0_32 = arith.constant 0 : index
    %91 = vector.load %arg7[%c0_30, %c0_31, %c0_32] : memref<4x2x32xf32, #tpu.memory_space<vmem>>, vector<1x2x32xf32>
    %92 = vector.shape_cast %91 : vector<1x2x32xf32> to vector<2x32xf32>
    %93 = vector.shape_cast %53 : vector<2x32xf32> to vector<1x2x32xf32>
    tpu.vector_store %arg7[%c0_30, %c0_31, %c0_32], %93 {strides = array<i32>} : memref<4x2x32xf32, #tpu.memory_space<vmem>>, vector<1x2x32xf32>,
    %c3_33 = arith.constant 3 : index
    %c0_34 = arith.constant 0 : index
    %c0_35 = arith.constant 0 : index
    %94 = vector.load %arg8[%c3_33, %c0_34, %c0_35] : memref<4x2x32xf32, #tpu.memory_space<vmem>>, vector<1x2x32xf32>
    %95 = vector.shape_cast %94 : vector<1x2x32xf32> to vector<2x32xf32>
    %96 = vector.shape_cast %90 : vector<2x32xf32> to vector<1x2x32xf32>
    tpu.vector_store %arg8[%c3_33, %c0_34, %c0_35], %96 {strides = array<i32>} : memref<4x2x32xf32, #tpu.memory_space<vmem>>, vector<1x2x32xf32>,
    %c1 = arith.constant 1 : index
    %c0_36 = arith.constant 0 : index
    %c0_37 = arith.constant 0 : index
    %97 = vector.load %arg1[%c1, %c0_36, %c0_37] : memref<4x2x128xf32, #tpu.memory_space<vmem>>, vector<1x2x128xf32>
    %98 = vector.shape_cast %97 : vector<1x2x128xf32> to vector<2x128xf32>
    %cst_38 = arith.constant dense<0.000000e+00> : vector<2x128xf32>
    %99 = tpu.matmul %47, %3, %cst_38 {dimension_numbers = #tpu.dot_dimension_numbers<[1], [0], [0], [1], [0, 0, 1, 1], [], []>} : vector<2x32xf32>, vector<32x128xf32>, vector<2x128xf32> -> vector<2x128xf32>
    %100 = arith.addf %98, %99 : vector<2x128xf32>
    %c2 = arith.constant 2 : index
    %c0_39 = arith.constant 0 : index
    %c0_40 = arith.constant 0 : index
    %101 = vector.load %arg2[%c2, %c0_39, %c0_40] : memref<4x2x128xf32, #tpu.memory_space<vmem>>, vector<1x2x128xf32>
    %102 = vector.shape_cast %101 : vector<1x2x128xf32> to vector<2x128xf32>
    %cst_41 = arith.constant dense<0.000000e+00> : vector<2x128xf32>
    %103 = tpu.matmul %84, %4, %cst_41 {dimension_numbers = #tpu.dot_dimension_numbers<[1], [0], [0], [1], [0, 0, 1, 1], [], []>} : vector<2x32xf32>, vector<32x128xf32>, vector<2x128xf32> -> vector<2x128xf32>
    %104 = arith.addf %102, %103 : vector<2x128xf32>
    %c1_42 = arith.constant 1 : index
    %c0_43 = arith.constant 0 : index
    %c0_44 = arith.constant 0 : index
    %105 = vector.load %arg3[%c1_42, %c0_43, %c0_44] : memref<4x2x1xf32, #tpu.memory_space<vmem>>, vector<1x2x1xf32>
    %106 = vector.shape_cast %105 : vector<1x2x1xf32> to vector<2x1xf32>
    %107 = vector.extract_strided_slice %100 {offsets = [0, 0], sizes = [2, 32], strides = [1, 1]} : vector<2x128xf32> to vector<2x32xf32>
    %108 = arith.negf %107 : vector<2x32xf32>
    %109 = math.exp %108 : vector<2x32xf32>
    %cst_45 = arith.constant 1.000000e+00 : f32
    %110 = vector.broadcast %cst_45 : f32 to vector<2x32xf32>
    %111 = arith.addf %110, %109 : vector<2x32xf32>
    %112 = arith.divf %110, %111 : vector<2x32xf32>
    %113 = vector.extract_strided_slice %100 {offsets = [0, 32], sizes = [2, 32], strides = [1, 1]} : vector<2x128xf32> to vector<2x32xf32>
    %114 = arith.negf %113 : vector<2x32xf32>
    %115 = math.exp %114 : vector<2x32xf32>
    %cst_46 = arith.constant 1.000000e+00 : f32
    %116 = vector.broadcast %cst_46 : f32 to vector<2x32xf32>
    %117 = arith.addf %116, %115 : vector<2x32xf32>
    %118 = arith.divf %116, %117 : vector<2x32xf32>
    %119 = vector.extract_strided_slice %100 {offsets = [0, 64], sizes = [2, 32], strides = [1, 1]} : vector<2x128xf32> to vector<2x32xf32>
    %120 = math.tanh %119 : vector<2x32xf32>
    %121 = vector.extract_strided_slice %100 {offsets = [0, 96], sizes = [2, 32], strides = [1, 1]} : vector<2x128xf32> to vector<2x32xf32>
    %122 = arith.negf %121 : vector<2x32xf32>
    %123 = math.exp %122 : vector<2x32xf32>
    %cst_47 = arith.constant 1.000000e+00 : f32
    %124 = vector.broadcast %cst_47 : f32 to vector<2x32xf32>
    %125 = arith.addf %124, %123 : vector<2x32xf32>
    %126 = arith.divf %124, %125 : vector<2x32xf32>
    %127 = arith.mulf %118, %51 : vector<2x32xf32>
    %128 = arith.mulf %112, %120 : vector<2x32xf32>
    %129 = arith.addf %127, %128 : vector<2x32xf32>
    %130 = math.tanh %129 : vector<2x32xf32>
    %131 = arith.mulf %126, %130 : vector<2x32xf32>
    %132 = arith.subf %131, %47 : vector<2x32xf32>
    %133 = vector.broadcast %106 : vector<2x1xf32> to vector<2x32xf32>
    %134 = arith.mulf %133, %132 : vector<2x32xf32>
    %135 = arith.addf %47, %134 : vector<2x32xf32>
    %136 = arith.subf %129, %51 : vector<2x32xf32>
    %137 = vector.broadcast %106 : vector<2x1xf32> to vector<2x32xf32>
    %138 = arith.mulf %137, %136 : vector<2x32xf32>
    %139 = arith.addf %51, %138 : vector<2x32xf32>
    %140 = vector.broadcast %106 : vector<2x1xf32> to vector<2x32xf32>
    %141 = arith.mulf %140, %131 : vector<2x32xf32>
    %c2_48 = arith.constant 2 : index
    %c0_49 = arith.constant 0 : index
    %c0_50 = arith.constant 0 : index
    %142 = vector.load %arg4[%c2_48, %c0_49, %c0_50] : memref<4x2x1xf32, #tpu.memory_space<vmem>>, vector<1x2x1xf32>
    %143 = vector.shape_cast %142 : vector<1x2x1xf32> to vector<2x1xf32>
    %144 = vector.extract_strided_slice %104 {offsets = [0, 0], sizes = [2, 32], strides = [1, 1]} : vector<2x128xf32> to vector<2x32xf32>
    %145 = arith.negf %144 : vector<2x32xf32>
    %146 = math.exp %145 : vector<2x32xf32>
    %cst_51 = arith.constant 1.000000e+00 : f32
    %147 = vector.broadcast %cst_51 : f32 to vector<2x32xf32>
    %148 = arith.addf %147, %146 : vector<2x32xf32>
    %149 = arith.divf %147, %148 : vector<2x32xf32>
    %150 = vector.extract_strided_slice %104 {offsets = [0, 32], sizes = [2, 32], strides = [1, 1]} : vector<2x128xf32> to vector<2x32xf32>
    %151 = arith.negf %150 : vector<2x32xf32>
    %152 = math.exp %151 : vector<2x32xf32>
    %cst_52 = arith.constant 1.000000e+00 : f32
    %153 = vector.broadcast %cst_52 : f32 to vector<2x32xf32>
    %154 = arith.addf %153, %152 : vector<2x32xf32>
    %155 = arith.divf %153, %154 : vector<2x32xf32>
    %156 = vector.extract_strided_slice %104 {offsets = [0, 64], sizes = [2, 32], strides = [1, 1]} : vector<2x128xf32> to vector<2x32xf32>
    %157 = math.tanh %156 : vector<2x32xf32>
    %158 = vector.extract_strided_slice %104 {offsets = [0, 96], sizes = [2, 32], strides = [1, 1]} : vector<2x128xf32> to vector<2x32xf32>
    %159 = arith.negf %158 : vector<2x32xf32>
    %160 = math.exp %159 : vector<2x32xf32>
    %cst_53 = arith.constant 1.000000e+00 : f32
    %161 = vector.broadcast %cst_53 : f32 to vector<2x32xf32>
    %162 = arith.addf %161, %160 : vector<2x32xf32>
    %163 = arith.divf %161, %162 : vector<2x32xf32>
    %164 = arith.mulf %155, %88 : vector<2x32xf32>
    %165 = arith.mulf %149, %157 : vector<2x32xf32>
    %166 = arith.addf %164, %165 : vector<2x32xf32>
    %167 = math.tanh %166 : vector<2x32xf32>
    %168 = arith.mulf %163, %167 : vector<2x32xf32>
    %169 = arith.subf %168, %84 : vector<2x32xf32>
    %170 = vector.broadcast %143 : vector<2x1xf32> to vector<2x32xf32>
    %171 = arith.mulf %170, %169 : vector<2x32xf32>
    %172 = arith.addf %84, %171 : vector<2x32xf32>
    %173 = arith.subf %166, %88 : vector<2x32xf32>
    %174 = vector.broadcast %143 : vector<2x1xf32> to vector<2x32xf32>
    %175 = arith.mulf %174, %173 : vector<2x32xf32>
    %176 = arith.addf %88, %175 : vector<2x32xf32>
    %177 = vector.broadcast %143 : vector<2x1xf32> to vector<2x32xf32>
    %178 = arith.mulf %177, %168 : vector<2x32xf32>
    %c1_54 = arith.constant 1 : index
    %c0_55 = arith.constant 0 : index
    %c0_56 = arith.constant 0 : index
    %179 = vector.load %arg7[%c1_54, %c0_55, %c0_56] : memref<4x2x32xf32, #tpu.memory_space<vmem>>, vector<1x2x32xf32>
    %180 = vector.shape_cast %179 : vector<1x2x32xf32> to vector<2x32xf32>
    %181 = vector.shape_cast %141 : vector<2x32xf32> to vector<1x2x32xf32>
    tpu.vector_store %arg7[%c1_54, %c0_55, %c0_56], %181 {strides = array<i32>} : memref<4x2x32xf32, #tpu.memory_space<vmem>>, vector<1x2x32xf32>,
    %c2_57 = arith.constant 2 : index
    %c0_58 = arith.constant 0 : index
    %c0_59 = arith.constant 0 : index
    %182 = vector.load %arg8[%c2_57, %c0_58, %c0_59] : memref<4x2x32xf32, #tpu.memory_space<vmem>>, vector<1x2x32xf32>
    %183 = vector.shape_cast %182 : vector<1x2x32xf32> to vector<2x32xf32>
    %184 = vector.shape_cast %178 : vector<2x32xf32> to vector<1x2x32xf32>
    tpu.vector_store %arg8[%c2_57, %c0_58, %c0_59], %184 {strides = array<i32>} : memref<4x2x32xf32, #tpu.memory_space<vmem>>, vector<1x2x32xf32>,
    %c2_60 = arith.constant 2 : index
    %c0_61 = arith.constant 0 : index
    %c0_62 = arith.constant 0 : index
    %185 = vector.load %arg1[%c2_60, %c0_61, %c0_62] : memref<4x2x128xf32, #tpu.memory_space<vmem>>, vector<1x2x128xf32>
    %186 = vector.shape_cast %185 : vector<1x2x128xf32> to vector<2x128xf32>
    %cst_63 = arith.constant dense<0.000000e+00> : vector<2x128xf32>
    %187 = tpu.matmul %135, %3, %cst_63 {dimension_numbers = #tpu.dot_dimension_numbers<[1], [0], [0], [1], [0, 0, 1, 1], [], []>} : vector<2x32xf32>, vector<32x128xf32>, vector<2x128xf32> -> vector<2x128xf32>
    %188 = arith.addf %186, %187 : vector<2x128xf32>
    %c1_64 = arith.constant 1 : index
    %c0_65 = arith.constant 0 : index
    %c0_66 = arith.constant 0 : index
    %189 = vector.load %arg2[%c1_64, %c0_65, %c0_66] : memref<4x2x128xf32, #tpu.memory_space<vmem>>, vector<1x2x128xf32>
    %190 = vector.shape_cast %189 : vector<1x2x128xf32> to vector<2x128xf32>
    %cst_67 = arith.constant dense<0.000000e+00> : vector<2x128xf32>
    %191 = tpu.matmul %172, %4, %cst_67 {dimension_numbers = #tpu.dot_dimension_numbers<[1], [0], [0], [1], [0, 0, 1, 1], [], []>} : vector<2x32xf32>, vector<32x128xf32>, vector<2x128xf32> -> vector<2x128xf32>
    %192 = arith.addf %190, %191 : vector<2x128xf32>
    %c2_68 = arith.constant 2 : index
    %c0_69 = arith.constant 0 : index
    %c0_70 = arith.constant 0 : index
    %193 = vector.load %arg3[%c2_68, %c0_69, %c0_70] : memref<4x2x1xf32, #tpu.memory_space<vmem>>, vector<1x2x1xf32>
    %194 = vector.shape_cast %193 : vector<1x2x1xf32> to vector<2x1xf32>
    %195 = vector.extract_strided_slice %188 {offsets = [0, 0], sizes = [2, 32], strides = [1, 1]} : vector<2x128xf32> to vector<2x32xf32>
    %196 = arith.negf %195 : vector<2x32xf32>
    %197 = math.exp %196 : vector<2x32xf32>
    %cst_71 = arith.constant 1.000000e+00 : f32
    %198 = vector.broadcast %cst_71 : f32 to vector<2x32xf32>
    %199 = arith.addf %198, %197 : vector<2x32xf32>
    %200 = arith.divf %198, %199 : vector<2x32xf32>
    %201 = vector.extract_strided_slice %188 {offsets = [0, 32], sizes = [2, 32], strides = [1, 1]} : vector<2x128xf32> to vector<2x32xf32>
    %202 = arith.negf %201 : vector<2x32xf32>
    %203 = math.exp %202 : vector<2x32xf32>
    %cst_72 = arith.constant 1.000000e+00 : f32
    %204 = vector.broadcast %cst_72 : f32 to vector<2x32xf32>
    %205 = arith.addf %204, %203 : vector<2x32xf32>
    %206 = arith.divf %204, %205 : vector<2x32xf32>
    %207 = vector.extract_strided_slice %188 {offsets = [0, 64], sizes = [2, 32], strides = [1, 1]} : vector<2x128xf32> to vector<2x32xf32>
    %208 = math.tanh %207 : vector<2x32xf32>
    %209 = vector.extract_strided_slice %188 {offsets = [0, 96], sizes = [2, 32], strides = [1, 1]} : vector<2x128xf32> to vector<2x32xf32>
    %210 = arith.negf %209 : vector<2x32xf32>
    %211 = math.exp %210 : vector<2x32xf32>
    %cst_73 = arith.constant 1.000000e+00 : f32
    %212 = vector.broadcast %cst_73 : f32 to vector<2x32xf32>
    %213 = arith.addf %212, %211 : vector<2x32xf32>
    %214 = arith.divf %212, %213 : vector<2x32xf32>
    %215 = arith.mulf %206, %139 : vector<2x32xf32>
    %216 = arith.mulf %200, %208 : vector<2x32xf32>
    %217 = arith.addf %215, %216 : vector<2x32xf32>
    %218 = math.tanh %217 : vector<2x32xf32>
    %219 = arith.mulf %214, %218 : vector<2x32xf32>
    %220 = arith.subf %219, %135 : vector<2x32xf32>
    %221 = vector.broadcast %194 : vector<2x1xf32> to vector<2x32xf32>
    %222 = arith.mulf %221, %220 : vector<2x32xf32>
    %223 = arith.addf %135, %222 : vector<2x32xf32>
    %224 = arith.subf %217, %139 : vector<2x32xf32>
    %225 = vector.broadcast %194 : vector<2x1xf32> to vector<2x32xf32>
    %226 = arith.mulf %225, %224 : vector<2x32xf32>
    %227 = arith.addf %139, %226 : vector<2x32xf32>
    %228 = vector.broadcast %194 : vector<2x1xf32> to vector<2x32xf32>
    %229 = arith.mulf %228, %219 : vector<2x32xf32>
    %c1_74 = arith.constant 1 : index
    %c0_75 = arith.constant 0 : index
    %c0_76 = arith.constant 0 : index
    %230 = vector.load %arg4[%c1_74, %c0_75, %c0_76] : memref<4x2x1xf32, #tpu.memory_space<vmem>>, vector<1x2x1xf32>
    %231 = vector.shape_cast %230 : vector<1x2x1xf32> to vector<2x1xf32>
    %232 = vector.extract_strided_slice %192 {offsets = [0, 0], sizes = [2, 32], strides = [1, 1]} : vector<2x128xf32> to vector<2x32xf32>
    %233 = arith.negf %232 : vector<2x32xf32>
    %234 = math.exp %233 : vector<2x32xf32>
    %cst_77 = arith.constant 1.000000e+00 : f32
    %235 = vector.broadcast %cst_77 : f32 to vector<2x32xf32>
    %236 = arith.addf %235, %234 : vector<2x32xf32>
    %237 = arith.divf %235, %236 : vector<2x32xf32>
    %238 = vector.extract_strided_slice %192 {offsets = [0, 32], sizes = [2, 32], strides = [1, 1]} : vector<2x128xf32> to vector<2x32xf32>
    %239 = arith.negf %238 : vector<2x32xf32>
    %240 = math.exp %239 : vector<2x32xf32>
    %cst_78 = arith.constant 1.000000e+00 : f32
    %241 = vector.broadcast %cst_78 : f32 to vector<2x32xf32>
    %242 = arith.addf %241, %240 : vector<2x32xf32>
    %243 = arith.divf %241, %242 : vector<2x32xf32>
    %244 = vector.extract_strided_slice %192 {offsets = [0, 64], sizes = [2, 32], strides = [1, 1]} : vector<2x128xf32> to vector<2x32xf32>
    %245 = math.tanh %244 : vector<2x32xf32>
    %246 = vector.extract_strided_slice %192 {offsets = [0, 96], sizes = [2, 32], strides = [1, 1]} : vector<2x128xf32> to vector<2x32xf32>
    %247 = arith.negf %246 : vector<2x32xf32>
    %248 = math.exp %247 : vector<2x32xf32>
    %cst_79 = arith.constant 1.000000e+00 : f32
    %249 = vector.broadcast %cst_79 : f32 to vector<2x32xf32>
    %250 = arith.addf %249, %248 : vector<2x32xf32>
    %251 = arith.divf %249, %250 : vector<2x32xf32>
    %252 = arith.mulf %243, %176 : vector<2x32xf32>
    %253 = arith.mulf %237, %245 : vector<2x32xf32>
    %254 = arith.addf %252, %253 : vector<2x32xf32>
    %255 = math.tanh %254 : vector<2x32xf32>
    %256 = arith.mulf %251, %255 : vector<2x32xf32>
    %257 = arith.subf %256, %172 : vector<2x32xf32>
    %258 = vector.broadcast %231 : vector<2x1xf32> to vector<2x32xf32>
    %259 = arith.mulf %258, %257 : vector<2x32xf32>
    %260 = arith.addf %172, %259 : vector<2x32xf32>
    %261 = arith.subf %254, %176 : vector<2x32xf32>
    %262 = vector.broadcast %231 : vector<2x1xf32> to vector<2x32xf32>
    %263 = arith.mulf %262, %261 : vector<2x32xf32>
    %264 = arith.addf %176, %263 : vector<2x32xf32>
    %265 = vector.broadcast %231 : vector<2x1xf32> to vector<2x32xf32>
    %266 = arith.mulf %265, %256 : vector<2x32xf32>
    %c2_80 = arith.constant 2 : index
    %c0_81 = arith.constant 0 : index
    %c0_82 = arith.constant 0 : index
    %267 = vector.load %arg7[%c2_80, %c0_81, %c0_82] : memref<4x2x32xf32, #tpu.memory_space<vmem>>, vector<1x2x32xf32>
    %268 = vector.shape_cast %267 : vector<1x2x32xf32> to vector<2x32xf32>
    %269 = vector.shape_cast %229 : vector<2x32xf32> to vector<1x2x32xf32>
    tpu.vector_store %arg7[%c2_80, %c0_81, %c0_82], %269 {strides = array<i32>} : memref<4x2x32xf32, #tpu.memory_space<vmem>>, vector<1x2x32xf32>,
    %c1_83 = arith.constant 1 : index
    %c0_84 = arith.constant 0 : index
    %c0_85 = arith.constant 0 : index
    %270 = vector.load %arg8[%c1_83, %c0_84, %c0_85] : memref<4x2x32xf32, #tpu.memory_space<vmem>>, vector<1x2x32xf32>
    %271 = vector.shape_cast %270 : vector<1x2x32xf32> to vector<2x32xf32>
    %272 = vector.shape_cast %266 : vector<2x32xf32> to vector<1x2x32xf32>
    tpu.vector_store %arg8[%c1_83, %c0_84, %c0_85], %272 {strides = array<i32>} : memref<4x2x32xf32, #tpu.memory_space<vmem>>, vector<1x2x32xf32>,
    %c3_86 = arith.constant 3 : index
    %c0_87 = arith.constant 0 : index
    %c0_88 = arith.constant 0 : index
    %273 = vector.load %arg1[%c3_86, %c0_87, %c0_88] : memref<4x2x128xf32, #tpu.memory_space<vmem>>, vector<1x2x128xf32>
    %274 = vector.shape_cast %273 : vector<1x2x128xf32> to vector<2x128xf32>
    %cst_89 = arith.constant dense<0.000000e+00> : vector<2x128xf32>
    %275 = tpu.matmul %223, %3, %cst_89 {dimension_numbers = #tpu.dot_dimension_numbers<[1], [0], [0], [1], [0, 0, 1, 1], [], []>} : vector<2x32xf32>, vector<32x128xf32>, vector<2x128xf32> -> vector<2x128xf32>
    %276 = arith.addf %274, %275 : vector<2x128xf32>
    %c0_90 = arith.constant 0 : index
    %c0_91 = arith.constant 0 : index
    %c0_92 = arith.constant 0 : index
    %277 = vector.load %arg2[%c0_90, %c0_91, %c0_92] : memref<4x2x128xf32, #tpu.memory_space<vmem>>, vector<1x2x128xf32>
    %278 = vector.shape_cast %277 : vector<1x2x128xf32> to vector<2x128xf32>
    %cst_93 = arith.constant dense<0.000000e+00> : vector<2x128xf32>
    %279 = tpu.matmul %260, %4, %cst_93 {dimension_numbers = #tpu.dot_dimension_numbers<[1], [0], [0], [1], [0, 0, 1, 1], [], []>} : vector<2x32xf32>, vector<32x128xf32>, vector<2x128xf32> -> vector<2x128xf32>
    %280 = arith.addf %278, %279 : vector<2x128xf32>
    %c3_94 = arith.constant 3 : index
    %c0_95 = arith.constant 0 : index
    %c0_96 = arith.constant 0 : index
    %281 = vector.load %arg3[%c3_94, %c0_95, %c0_96] : memref<4x2x1xf32, #tpu.memory_space<vmem>>, vector<1x2x1xf32>
    %282 = vector.shape_cast %281 : vector<1x2x1xf32> to vector<2x1xf32>
    %283 = vector.extract_strided_slice %276 {offsets = [0, 0], sizes = [2, 32], strides = [1, 1]} : vector<2x128xf32> to vector<2x32xf32>
    %284 = arith.negf %283 : vector<2x32xf32>
    %285 = math.exp %284 : vector<2x32xf32>
    %cst_97 = arith.constant 1.000000e+00 : f32
    %286 = vector.broadcast %cst_97 : f32 to vector<2x32xf32>
    %287 = arith.addf %286, %285 : vector<2x32xf32>
    %288 = arith.divf %286, %287 : vector<2x32xf32>
    %289 = vector.extract_strided_slice %276 {offsets = [0, 32], sizes = [2, 32], strides = [1, 1]} : vector<2x128xf32> to vector<2x32xf32>
    %290 = arith.negf %289 : vector<2x32xf32>
    %291 = math.exp %290 : vector<2x32xf32>
    %cst_98 = arith.constant 1.000000e+00 : f32
    %292 = vector.broadcast %cst_98 : f32 to vector<2x32xf32>
    %293 = arith.addf %292, %291 : vector<2x32xf32>
    %294 = arith.divf %292, %293 : vector<2x32xf32>
    %295 = vector.extract_strided_slice %276 {offsets = [0, 64], sizes = [2, 32], strides = [1, 1]} : vector<2x128xf32> to vector<2x32xf32>
    %296 = math.tanh %295 : vector<2x32xf32>
    %297 = vector.extract_strided_slice %276 {offsets = [0, 96], sizes = [2, 32], strides = [1, 1]} : vector<2x128xf32> to vector<2x32xf32>
    %298 = arith.negf %297 : vector<2x32xf32>
    %299 = math.exp %298 : vector<2x32xf32>
    %cst_99 = arith.constant 1.000000e+00 : f32
    %300 = vector.broadcast %cst_99 : f32 to vector<2x32xf32>
    %301 = arith.addf %300, %299 : vector<2x32xf32>
    %302 = arith.divf %300, %301 : vector<2x32xf32>
    %303 = arith.mulf %294, %227 : vector<2x32xf32>
    %304 = arith.mulf %288, %296 : vector<2x32xf32>
    %305 = arith.addf %303, %304 : vector<2x32xf32>
    %306 = math.tanh %305 : vector<2x32xf32>
    %307 = arith.mulf %302, %306 : vector<2x32xf32>
    %308 = arith.subf %307, %223 : vector<2x32xf32>
    %309 = vector.broadcast %282 : vector<2x1xf32> to vector<2x32xf32>
    %310 = arith.mulf %309, %308 : vector<2x32xf32>
    %311 = arith.addf %223, %310 : vector<2x32xf32>
    %312 = arith.subf %305, %227 : vector<2x32xf32>
    %313 = vector.broadcast %282 : vector<2x1xf32> to vector<2x32xf32>
    %314 = arith.mulf %313, %312 : vector<2x32xf32>
    %315 = arith.addf %227, %314 : vector<2x32xf32>
    %316 = vector.broadcast %282 : vector<2x1xf32> to vector<2x32xf32>
    %317 = arith.mulf %316, %307 : vector<2x32xf32>
    %c0_100 = arith.constant 0 : index
    %c0_101 = arith.constant 0 : index
    %c0_102 = arith.constant 0 : index
    %318 = vector.load %arg4[%c0_100, %c0_101, %c0_102] : memref<4x2x1xf32, #tpu.memory_space<vmem>>, vector<1x2x1xf32>
    %319 = vector.shape_cast %318 : vector<1x2x1xf32> to vector<2x1xf32>
    %320 = vector.extract_strided_slice %280 {offsets = [0, 0], sizes = [2, 32], strides = [1, 1]} : vector<2x128xf32> to vector<2x32xf32>
    %321 = arith.negf %320 : vector<2x32xf32>
    %322 = math.exp %321 : vector<2x32xf32>
    %cst_103 = arith.constant 1.000000e+00 : f32
    %323 = vector.broadcast %cst_103 : f32 to vector<2x32xf32>
    %324 = arith.addf %323, %322 : vector<2x32xf32>
    %325 = arith.divf %323, %324 : vector<2x32xf32>
    %326 = vector.extract_strided_slice %280 {offsets = [0, 32], sizes = [2, 32], strides = [1, 1]} : vector<2x128xf32> to vector<2x32xf32>
    %327 = arith.negf %326 : vector<2x32xf32>
    %328 = math.exp %327 : vector<2x32xf32>
    %cst_104 = arith.constant 1.000000e+00 : f32
    %329 = vector.broadcast %cst_104 : f32 to vector<2x32xf32>
    %330 = arith.addf %329, %328 : vector<2x32xf32>
    %331 = arith.divf %329, %330 : vector<2x32xf32>
    %332 = vector.extract_strided_slice %280 {offsets = [0, 64], sizes = [2, 32], strides = [1, 1]} : vector<2x128xf32> to vector<2x32xf32>
    %333 = math.tanh %332 : vector<2x32xf32>
    %334 = vector.extract_strided_slice %280 {offsets = [0, 96], sizes = [2, 32], strides = [1, 1]} : vector<2x128xf32> to vector<2x32xf32>
    %335 = arith.negf %334 : vector<2x32xf32>
    %336 = math.exp %335 : vector<2x32xf32>
    %cst_105 = arith.constant 1.000000e+00 : f32
    %337 = vector.broadcast %cst_105 : f32 to vector<2x32xf32>
    %338 = arith.addf %337, %336 : vector<2x32xf32>
    %339 = arith.divf %337, %338 : vector<2x32xf32>
    %340 = arith.mulf %331, %264 : vector<2x32xf32>
    %341 = arith.mulf %325, %333 : vector<2x32xf32>
    %342 = arith.addf %340, %341 : vector<2x32xf32>
    %343 = math.tanh %342 : vector<2x32xf32>
    %344 = arith.mulf %339, %343 : vector<2x32xf32>
    %345 = arith.subf %344, %260 : vector<2x32xf32>
    %346 = vector.broadcast %319 : vector<2x1xf32> to vector<2x32xf32>
    %347 = arith.mulf %346, %345 : vector<2x32xf32>
    %348 = arith.addf %260, %347 : vector<2x32xf32>
    %349 = arith.subf %342, %264 : vector<2x32xf32>
    %350 = vector.broadcast %319 : vector<2x1xf32> to vector<2x32xf32>
    %351 = arith.mulf %350, %349 : vector<2x32xf32>
    %352 = arith.addf %264, %351 : vector<2x32xf32>
    %353 = vector.broadcast %319 : vector<2x1xf32> to vector<2x32xf32>
    %354 = arith.mulf %353, %344 : vector<2x32xf32>
    %c3_106 = arith.constant 3 : index
    %c0_107 = arith.constant 0 : index
    %c0_108 = arith.constant 0 : index
    %355 = vector.load %arg7[%c3_106, %c0_107, %c0_108] : memref<4x2x32xf32, #tpu.memory_space<vmem>>, vector<1x2x32xf32>
    %356 = vector.shape_cast %355 : vector<1x2x32xf32> to vector<2x32xf32>
    %357 = vector.shape_cast %317 : vector<2x32xf32> to vector<1x2x32xf32>
    tpu.vector_store %arg7[%c3_106, %c0_107, %c0_108], %357 {strides = array<i32>} : memref<4x2x32xf32, #tpu.memory_space<vmem>>, vector<1x2x32xf32>,
    %c0_109 = arith.constant 0 : index
    %c0_110 = arith.constant 0 : index
    %c0_111 = arith.constant 0 : index
    %358 = vector.load %arg8[%c0_109, %c0_110, %c0_111] : memref<4x2x32xf32, #tpu.memory_space<vmem>>, vector<1x2x32xf32>
    %359 = vector.shape_cast %358 : vector<1x2x32xf32> to vector<2x32xf32>
    %360 = vector.shape_cast %354 : vector<2x32xf32> to vector<1x2x32xf32>
    tpu.vector_store %arg8[%c0_109, %c0_110, %c0_111], %360 {strides = array<i32>} : memref<4x2x32xf32, #tpu.memory_space<vmem>>, vector<1x2x32xf32>,
    %c0_112 = arith.constant 0 : index
    %c0_113 = arith.constant 0 : index
    %361 = vector.load %arg9[%c0_112, %c0_113] : memref<2x32xf32, #tpu.memory_space<vmem>>, vector<2x32xf32>
    tpu.vector_store %arg9[%c0_112, %c0_113], %311 {strides = array<i32>} : memref<2x32xf32, #tpu.memory_space<vmem>>, vector<2x32xf32>,
    %c0_114 = arith.constant 0 : index
    %c0_115 = arith.constant 0 : index
    %362 = vector.load %arg10[%c0_114, %c0_115] : memref<2x32xf32, #tpu.memory_space<vmem>>, vector<2x32xf32>
    tpu.vector_store %arg10[%c0_114, %c0_115], %315 {strides = array<i32>} : memref<2x32xf32, #tpu.memory_space<vmem>>, vector<2x32xf32>,
    %c0_116 = arith.constant 0 : index
    %c0_117 = arith.constant 0 : index
    %363 = vector.load %arg11[%c0_116, %c0_117] : memref<2x32xf32, #tpu.memory_space<vmem>>, vector<2x32xf32>
    tpu.vector_store %arg11[%c0_116, %c0_117], %348 {strides = array<i32>} : memref<2x32xf32, #tpu.memory_space<vmem>>, vector<2x32xf32>,
    %c0_118 = arith.constant 0 : index
    %c0_119 = arith.constant 0 : index
    %364 = vector.load %arg12[%c0_118, %c0_119] : memref<2x32xf32, #tpu.memory_space<vmem>>, vector<2x32xf32>
    tpu.vector_store %arg12[%c0_118, %c0_119], %352 {strides = array<i32>} : memref<2x32xf32, #tpu.memory_space<vmem>>, vector<2x32xf32>,
    return
  }
  func.func @transform_0(%arg0: i32) -> (i32, i32, i32) {
    %c0_i32 = arith.constant 0 : i32
    %c0_i32_0 = arith.constant 0 : i32
    %c0_i32_1 = arith.constant 0 : i32
    return %arg0, %c0_i32, %c0_i32_0 : i32, i32, i32
  }
  func.func @transform_1(%arg0: i32) -> (i32, i32, i32) {
    %c0_i32 = arith.constant 0 : i32
    %0 = arith.subi %c0_i32, %arg0 : i32
    %c0_i32_0 = arith.constant 0 : i32
    %c0_i32_1 = arith.constant 0 : i32
    %c0_i32_2 = arith.constant 0 : i32
    return %0, %c0_i32_0, %c0_i32_1 : i32, i32, i32
  }
  func.func @transform_2(%arg0: i32) -> (i32, i32, i32) {
    %c0_i32 = arith.constant 0 : i32
    %c0_i32_0 = arith.constant 0 : i32
    %c0_i32_1 = arith.constant 0 : i32
    return %arg0, %c0_i32, %c0_i32_0 : i32, i32, i32
  }
  func.func @transform_3(%arg0: i32) -> (i32, i32, i32) {
    %c0_i32 = arith.constant 0 : i32
    %0 = arith.subi %c0_i32, %arg0 : i32
    %c0_i32_0 = arith.constant 0 : i32
    %c0_i32_1 = arith.constant 0 : i32
    %c0_i32_2 = arith.constant 0 : i32
    return %0, %c0_i32_0, %c0_i32_1 : i32, i32, i32
  }
  func.func @transform_4(%arg0: i32) -> (i32, i32) {
    %c0_i32 = arith.constant 0 : i32
    %c0_i32_0 = arith.constant 0 : i32
    %c0_i32_1 = arith.constant 0 : i32
    return %c0_i32, %c0_i32_0 : i32, i32
  }
  func.func @transform_5(%arg0: i32) -> (i32, i32) {
    %c0_i32 = arith.constant 0 : i32
    %c0_i32_0 = arith.constant 0 : i32
    %c0_i32_1 = arith.constant 0 : i32
    return %c0_i32, %c0_i32_0 : i32, i32
  }
  func.func @transform_6(%arg0: i32) -> (i32, i32, i32) {
    %c0_i32 = arith.constant 0 : i32
    %c0_i32_0 = arith.constant 0 : i32
    %c0_i32_1 = arith.constant 0 : i32
    return %arg0, %c0_i32, %c0_i32_0 : i32, i32, i32
  }
  func.func @transform_7(%arg0: i32) -> (i32, i32, i32) {
    %c0_i32 = arith.constant 0 : i32
    %0 = arith.subi %c0_i32, %arg0 : i32
    %c0_i32_0 = arith.constant 0 : i32
    %c0_i32_1 = arith.constant 0 : i32
    %c0_i32_2 = arith.constant 0 : i32
    return %0, %c0_i32_0, %c0_i32_1 : i32, i32, i32
  }
}

</mosaic_0001>

<llo_original>
// kernel: tpu_custom_call.1
$region0: #{tpu_custom_call.1}
  #allocation0 [shape = 'u32[]', space=smem, size = 0x4, offset = 0x4, fixed_abs, tag = 'smem constant byte address 0x4 - core index']
  #allocation1 [shape = 'u32[144,128]{1,0:T(1,128)}', space=vmem, size = 0x12000, scoped, tag = 'internal scratch']
  #allocation2 [shape = 'f32[2,32]{1,0:T(2,128)}', space=vmem, size = 0x400, scoped, tag = 'scratch operand']
  #allocation3 [shape = 'f32[2,32]{1,0:T(2,128)}', space=vmem, size = 0x400, scoped, tag = 'scratch operand']
  #allocation4 [shape = 'f32[2,32]{1,0:T(2,128)}', space=vmem, size = 0x400, scoped, tag = 'scratch operand']
  #allocation5 [shape = 'f32[2,32]{1,0:T(2,128)}', space=vmem, size = 0x400, scoped, tag = 'scratch operand']
  %s0 = inlined_call_operand.hbm [shape: f32[4,2,128], index: 0, kind: input, shape index: {}]
  %s1 = inlined_call_operand.hbm [shape: f32[4,2,128], index: 1, kind: input, shape index: {}]
  %s2 = inlined_call_operand.vmem [shape: f32[4,2,1], index: 2, kind: input, shape index: {}]
  %s3 = inlined_call_operand.vmem [shape: f32[4,2,1], index: 3, kind: input, shape index: {}]
  %s4 = inlined_call_operand.vmem [shape: f32[32,128], index: 4, kind: input, shape index: {}]
  %s5 = inlined_call_operand.hbm [shape: f32[32,128], index: 5, kind: input, shape index: {}]
  %s6 = inlined_call_operand.hbm [shape: f32[4,2,32], index: 6, kind: output, shape index: {0}]
  %s7 = inlined_call_operand.hbm [shape: f32[4,2,32], index: 7, kind: output, shape index: {1}]
  %8 = xla_tuple %s6, %s7
  %s9 = sld [smem:[#allocation0]]
  $region58: #{tpu_custom_call.1} parent=0
    _
  %s11 = ssub.s32 1, %s9
  %s12 = scalar_select 0, %s11, %s9
  $region1: #{tpu_custom_call.1} parent=0
    #allocation6 [shape = 'u8[4096]{0}', space=vmem, size = 0x1000, scoped, tag = 'input window, operand 0, single buffered']
    #allocation7 [shape = 's32[1]{0}', space=sflag, size = 0x4, scoped, tag = 'scoped memory for tpu_custom_call.1']
    #allocation8 [shape = 's32[1]{0}', space=sflag, size = 0x4, scoped, tag = 'scoped memory for tpu_custom_call.1']
    #allocation9 [shape = 'u8[4096]{0}', space=vmem, size = 0x1000, scoped, tag = 'input window, operand 1, single buffered']
    #allocation10 [shape = 's32[1]{0}', space=sflag, size = 0x4, scoped, tag = 'scoped memory for tpu_custom_call.1']
    #allocation11 [shape = 'u8[16384]{0}', space=vmem, size = 0x4000, scoped, tag = 'input window, operand 5, single buffered']
    #allocation12 [shape = 'u8[4096]{0}', space=vmem, size = 0x1000, scoped, tag = 'output window, operand 0, single buffered']
    #allocation13 [shape = 'u8[4096]{0}', space=vmem, size = 0x1000, scoped, tag = 'output window, operand 1, single buffered']
    #allocation14 [shape = 's32[1]{0}', space=sflag, size = 0x4, scoped, tag = 'scoped memory for tpu_custom_call.1']
    %13 = vsyncpa [#allocation7], 0
    %14 = vsyncpa [#allocation10], 0
    %15 = vsyncpa [#allocation8], 0
    %16 = vsyncpa [#allocation14], 0
    // Predicated region
    $region2: #{tpu_custom_call.1} parent=1 // pred_check
      _
    $region3: #{tpu_custom_call.1} parent=1 // pred_check_branch
      %18 = sbr.rel (0) target = $region5
    $region4: #{tpu_custom_call.1} parent=1 // pred_region
      %s20 = ssub.s32 128, 128
      %21 = vsyncadd [#allocation7], %s20
      %s22 = sshll.u32 [#allocation6], 4
      %s23 = int_to_ptr.vmem [resolvable:$true] %s22
      %28 = dma.hbm_to_vmem [thread:$0]  %s0, 128, %s23, [#allocation7], 32, 32, 2
    $region5: #{tpu_custom_call.1} parent=1 // pred_fallthru
      _
    // Predicated region
    $region6: #{tpu_custom_call.1} parent=1 // pred_check
      _
    $region7: #{tpu_custom_call.1} parent=1 // pred_check_branch
      %30 = sbr.rel (0) target = $region9
    $region8: #{tpu_custom_call.1} parent=1 // pred_region
      %s31 = ssub.s32 0, 0
      %s32 = smul.u32 4, %s31
      %s34 = ssub.s32 128, 128
      %35 = vsyncadd [#allocation10], %s34
      %s36 = smul.addr %s32, 32
      %s37 = scalar_lea.hbm %s1, %s36
      %s38 = sshll.u32 [#allocation9], 4
      %s39 = int_to_ptr.vmem [resolvable:$true] %s38
      %44 = dma.hbm_to_vmem [thread:$0]  %s37, 128, %s39, [#allocation10], 32, 32, 2
    $region9: #{tpu_custom_call.1} parent=1 // pred_fallthru
      _
    // Predicated region
    $region10: #{tpu_custom_call.1} parent=1 // pred_check
      _
    $region11: #{tpu_custom_call.1} parent=1 // pred_check_branch
      %46 = sbr.rel (0) target = $region13
    $region12: #{tpu_custom_call.1} parent=1 // pred_region
      _
    $region13: #{tpu_custom_call.1} parent=1 // pred_fallthru
      _
    // Predicated region
    $region14: #{tpu_custom_call.1} parent=1 // pred_check
      _
    $region15: #{tpu_custom_call.1} parent=1 // pred_check_branch
      %48 = sbr.rel (0) target = $region17
    $region16: #{tpu_custom_call.1} parent=1 // pred_region
      %s49 = ssub.s32 0, 0
      %s50 = smul.u32 4, %s49
      %p51 = scmp.lt.s32.totalorder %s50, 3
      %s52 = scalar_select %p51, %s50, 3
      %s53 = smul.addr %s52, 2
      %s54 = scalar_lea.vmem %s3, %s53
      %s55 = ssub.s32 0, 0
      %s56 = smul.u32 4, %s55
    $region17: #{tpu_custom_call.1} parent=1 // pred_fallthru
      _
    // Predicated region
    $region18: #{tpu_custom_call.1} parent=1 // pred_check
      _
    $region19: #{tpu_custom_call.1} parent=1 // pred_check_branch
      %58 = sbr.rel (0) target = $region21
    $region20: #{tpu_custom_call.1} parent=1 // pred_region
      _
    $region21: #{tpu_custom_call.1} parent=1 // pred_fallthru
      _
    // Predicated region
    $region22: #{tpu_custom_call.1} parent=1 // pred_check
      _
    $region23: #{tpu_custom_call.1} parent=1 // pred_check_branch
      %60 = sbr.rel (0) target = $region25
    $region24: #{tpu_custom_call.1} parent=1 // pred_region
      %s62 = ssub.s32 512, 512
      %63 = vsyncadd [#allocation10], %s62
      %s64 = sshll.u32 [#allocation11], 4
      %s65 = int_to_ptr.vmem [resolvable:$true] %s64
      %70 = dma.hbm_to_vmem [thread:$0]  %s5, 512, %s65, [#allocation10], 128, 128, 8
    $region25: #{tpu_custom_call.1} parent=1 // pred_fallthru
      _
    // Predicated region
    $region26: #{tpu_custom_call.1} parent=1 // pred_check
      _
    $region27: #{tpu_custom_call.1} parent=1 // pred_check_branch
      %72 = sbr.rel (0) target = $region29
    $region28: #{tpu_custom_call.1} parent=1 // pred_region
      %73 = dma.done [#allocation7], 128
    $region29: #{tpu_custom_call.1} parent=1 // pred_fallthru
      _
    // Predicated region
    $region30: #{tpu_custom_call.1} parent=1 // pred_check
      _
    $region31: #{tpu_custom_call.1} parent=1 // pred_check_branch
      %75 = sbr.rel (0) target = $region33
    $region32: #{tpu_custom_call.1} parent=1 // pred_region
      %76 = dma.done [#allocation10], 128
    $region33: #{tpu_custom_call.1} parent=1 // pred_fallthru
      _
    // Predicated region
    $region34: #{tpu_custom_call.1} parent=1 // pred_check
      _
    $region35: #{tpu_custom_call.1} parent=1 // pred_check_branch
      %78 = sbr.rel (0) target = $region37
    $region36: #{tpu_custom_call.1} parent=1 // pred_region
      %79 = dma.done [#allocation10], 512
    $region37: #{tpu_custom_call.1} parent=1 // pred_fallthru
      _
    %s80 = ssub.s32 0, 0
    %s81 = smul.u32 4, %s80
    %p82 = scmp.lt.s32.totalorder %s81, 3
    %s83 = scalar_select %p82, %s81, 3
    %s84 = smul.addr %s83, 2
    %s85 = scalar_lea.vmem %s3, %s84
    %s86 = ssub.s32 0, 0
    %s87 = smul.u32 4, %s86
    %s88 = ssub.s32 0, 0
    %s89 = smul.u32 4, %s88
    %p90 = scmp.lt.s32.totalorder %s89, 3
    %s91 = scalar_select %p90, %s89, 3
    %s92 = smul.addr %s91, 2
    %s93 = scalar_lea.vmem %s3, %s92
    %s94 = ssub.s32 0, 0
    %s95 = smul.u32 4, %s94
    %s96 = ssub.s32 0, 0
    %s97 = smul.u32 4, %s96
    %p98 = scmp.eq.s32.totalorder 0, 0
    // Predicated region
    $region38: #{tpu_custom_call.1} parent=1 // pred_check
      %p99 = pneg %p98
    $region39: #{tpu_custom_call.1} parent=1 // pred_check_branch
      %101 = sbr.rel (%p99) target = $region41
    $region40: #{tpu_custom_call.1} parent=1 // pred_region
      %vm102 = vcmask 254976
      %103 = vst.msk [vmem:[#allocation2] sm:$0x3] %vm102, 0.0
      %104 = vst.msk [vmem:[#allocation3] sm:$0x3] %vm102, 0.0
      %105 = vst.msk [vmem:[#allocation4] sm:$0x3] %vm102, 0.0
      %106 = vst.msk [vmem:[#allocation5] sm:$0x3] %vm102, 0.0
    $region41: #{tpu_custom_call.1} parent=1 // pred_fallthru
      _
    %v107 = vld [vmem:[%s4] sm:$0xff]
    %v108 = vld [vmem:[%s4 + $0x8] sm:$0xff]
    %v109 = vld [vmem:[%s4 + $0x10] sm:$0xff]
    %v110 = vld [vmem:[%s4 + $0x18] sm:$0xff]
    %v111 = vld [vmem:[#allocation11] sm:$0xff]
    %v112 = vld [vmem:[#allocation11 + $0x8] sm:$0xff]
    %v113 = vld [vmem:[#allocation11 + $0x10] sm:$0xff]
    %v114 = vld [vmem:[#allocation11 + $0x18] sm:$0xff]
    %v115 = vld [vmem:[#allocation2] sm:$0x3]
    %v116 = vld [vmem:[#allocation3] sm:$0x3]
    %v117 = vld [vmem:[#allocation4] sm:$0x3]
    %v118 = vld [vmem:[#allocation5] sm:$0x3]
    %v119 = vld [vmem:[#allocation6] sm:$0x3]
    %vm120 = vcmask 261120
    %v122 = vsel %vm120, %v115, 0
    %124 = vmatprep.subr.mxu0 0.0
    %125 = vmatpush1.msra.mxu0 %v107
    %126 = vmatprep.subr.mxu0 0.0
    %127 = vmatpush1.msra.mxu0 %v108
    %128 = vmatprep.subr.mxu0 0.0
    %129 = vmatpush1.msra.mxu0 %v109
    %130 = vmatprep.subr.mxu0 0.0
    %131 = vmatpush1.msra.mxu0 %v110
    %132 = vmatprep.subr.mxu0 0.0
    %133 = vmatpush1.msra.mxu0 0.0
    %134 = vmatprep.subr.mxu0 0.0
    %135 = vmatpush1.msra.mxu0 0.0
    %136 = vmatprep.subr.mxu0 0.0
    %137 = vmatpush1.msra.mxu0 0.0
    %138 = vmatprep.subr.mxu0 0.0
    %139 = vmatpush1.msra.mxu0 0.0
    %140 = vmatprep.subr.mxu0 0.0
    %141 = vmatpush1.msra.mxu0 0.0
    %142 = vmatprep.subr.mxu0 0.0
    %143 = vmatpush1.msra.mxu0 0.0
    %144 = vmatprep.subr.mxu0 0.0
    %145 = vmatpush1.msra.mxu0 0.0
    %146 = vmatprep.subr.mxu0 0.0
    %147 = vmatpush1.msra.mxu0 0.0
    %148 = vmatprep.subr.mxu0 0.0
    %149 = vmatpush1.msra.mxu0 0.0
    %150 = vmatprep.subr.mxu0 0.0
    %151 = vmatpush1.msra.mxu0 0.0
    %152 = vmatprep.subr.mxu0 0.0
    %153 = vmatpush1.msra.mxu0 0.0
    %154 = vmatprep.subr.mxu0 0.0
    %155 = vmatpush1.msra.mxu0 0.0
    %156 = vmatprep.subr.mxu0 0.0
    %157 = vmatpush1.msra.mxu0 0.0
    %158 = vmatprep.subr.mxu0 0.0
    %159 = vmatpush1.msra.mxu0 0.0
    %160 = vmatprep.subr.mxu0 0.0
    %161 = vmatpush1.msra.mxu0 0.0
    %162 = vmatprep.subr.mxu0 0.0
    %163 = vmatpush1.msra.mxu0 0.0
    %164 = vmatprep.subr.mxu0 0.0
    %165 = vmatpush1.msra.mxu0 0.0
    %166 = vmatprep.subr.mxu0 0.0
    %167 = vmatpush1.msra.mxu0 0.0
    %168 = vmatprep.subr.mxu0 0.0
    %169 = vmatpush1.msra.mxu0 0.0
    %170 = vmatprep.subr.mxu0 0.0
    %171 = vmatpush1.msra.mxu0 0.0
    %172 = vmatprep.subr.mxu0 0.0
    %173 = vmatpush1.msra.mxu0 0.0
    %174 = vmatprep.subr.mxu0 0.0
    %175 = vmatpush1.msra.mxu0 0.0
    %176 = vmatprep.subr.mxu0 0.0
    %177 = vmatpush1.msra.mxu0 0.0
    %178 = vmatprep.subr.mxu0 0.0
    %179 = vmatpush1.msra.mxu0 0.0
    %180 = vmatprep.subr.mxu0 0.0
    %181 = vmatpush1.msra.mxu0 0.0
    %182 = vmatprep.subr.mxu0 0.0
    %183 = vmatpush1.msra.mxu0 0.0
    %184 = vmatprep.subr.mxu0 0.0
    %185 = vmatpush1.msra.mxu0 0.0
    %186 = vmatprep.subr.mxu0 0.0
    %187 = vmatpush1.msra.mxu0 0.0
    %188 = vmatprep.mubr.f32.mxu0 0.0
    %189 = vmatmul.mubr.f32.gmra.mrb[0].mxu0 %v122
    %v190 = vpop.f32.mrb[0].mxu0
    %v191 = vadd.f32 0.0, %v190
    %v192 = vpop.f32.mrb[0].mxu0
    %193 = vdwg.mxu0
    %v194 = vadd.f32 %v119, %v191
    %s195 = scalar_lea.vmem [#allocation9], 6
    %v196 = vld [vmem:[%s195] sm:$0x3]
    %v198 = vsel %vm120, %v117, 0
    %200 = vmatprep.subr.mxu0 0.0
    %201 = vmatpush1.msra.mxu0 %v111
    %202 = vmatprep.subr.mxu0 0.0
    %203 = vmatpush1.msra.mxu0 %v112
    %204 = vmatprep.subr.mxu0 0.0
    %205 = vmatpush1.msra.mxu0 %v113
    %206 = vmatprep.subr.mxu0 0.0
    %207 = vmatpush1.msra.mxu0 %v114
    %208 = vmatprep.subr.mxu0 0.0
    %209 = vmatpush1.msra.mxu0 0.0
    %210 = vmatprep.subr.mxu0 0.0
    %211 = vmatpush1.msra.mxu0 0.0
    %212 = vmatprep.subr.mxu0 0.0
    %213 = vmatpush1.msra.mxu0 0.0
    %214 = vmatprep.subr.mxu0 0.0
    %215 = vmatpush1.msra.mxu0 0.0
    %216 = vmatprep.subr.mxu0 0.0
    %217 = vmatpush1.msra.mxu0 0.0
    %218 = vmatprep.subr.mxu0 0.0
    %219 = vmatpush1.msra.mxu0 0.0
    %220 = vmatprep.subr.mxu0 0.0
    %221 = vmatpush1.msra.mxu0 0.0
    %222 = vmatprep.subr.mxu0 0.0
    %223 = vmatpush1.msra.mxu0 0.0
    %224 = vmatprep.subr.mxu0 0.0
    %225 = vmatpush1.msra.mxu0 0.0
    %226 = vmatprep.subr.mxu0 0.0
    %227 = vmatpush1.msra.mxu0 0.0
    %228 = vmatprep.subr.mxu0 0.0
    %229 = vmatpush1.msra.mxu0 0.0
    %230 = vmatprep.subr.mxu0 0.0
    %231 = vmatpush1.msra.mxu0 0.0
    %232 = vmatprep.subr.mxu0 0.0
    %233 = vmatpush1.msra.mxu0 0.0
    %234 = vmatprep.subr.mxu0 0.0
    %235 = vmatpush1.msra.mxu0 0.0
    %236 = vmatprep.subr.mxu0 0.0
    %237 = vmatpush1.msra.mxu0 0.0
    %238 = vmatprep.subr.mxu0 0.0
    %239 = vmatpush1.msra.mxu0 0.0
    %240 = vmatprep.subr.mxu0 0.0
    %241 = vmatpush1.msra.mxu0 0.0
    %242 = vmatprep.subr.mxu0 0.0
    %243 = vmatpush1.msra.mxu0 0.0
    %244 = vmatprep.subr.mxu0 0.0
    %245 = vmatpush1.msra.mxu0 0.0
    %246 = vmatprep.subr.mxu0 0.0
    %247 = vmatpush1.msra.mxu0 0.0
    %248 = vmatprep.subr.mxu0 0.0
    %249 = vmatpush1.msra.mxu0 0.0
    %250 = vmatprep.subr.mxu0 0.0
    %251 = vmatpush1.msra.mxu0 0.0
    %252 = vmatprep.subr.mxu0 0.0
    %253 = vmatpush1.msra.mxu0 0.0
    %254 = vmatprep.subr.mxu0 0.0
    %255 = vmatpush1.msra.mxu0 0.0
    %256 = vmatprep.subr.mxu0 0.0
    %257 = vmatpush1.msra.mxu0 0.0
    %258 = vmatprep.subr.mxu0 0.0
    %259 = vmatpush1.msra.mxu0 0.0
    %260 = vmatprep.subr.mxu0 0.0
    %261 = vmatpush1.msra.mxu0 0.0
    %262 = vmatprep.subr.mxu0 0.0
    %263 = vmatpush1.msra.mxu0 0.0
    %264 = vmatprep.mubr.f32.mxu0 0.0
    %265 = vmatmul.mubr.f32.gmra.mrb[0].mxu0 %v198
    %v266 = vpop.f32.mrb[0].mxu0
    %v267 = vadd.f32 0.0, %v266
    %v268 = vpop.f32.mrb[0].mxu0
    %269 = vdwg.mxu0
    %v270 = vadd.f32 %v196, %v267
    %v271 = vld [vmem:[%s2] sm:$0x3]
    %v272 = vxor.u32 %v194, 2147483648
    %v273 = vmul.f32 %v272, 1.442695
    %v274 = vpow.pop %v273
    %v275 = vadd.f32 %v274, 1.0
    %v276 = vrcp.pop %v275
    %v277 = vmul.f32 1.0, %v276
    %v278 = vtanh.pop %v194
    %280 = vrot.lane.b32.xlu0 %v116, 32
    %v281 = vpop.permute.xlu0 %280
    %v283 = vmul.f32 %v277, %v281
    %285 = vrot.lane.b32.xlu0 %v278, 64
    %v286 = vpop.permute.xlu0 %285
    %v288 = vmul.f32 %v277, %v286
    %290 = vrot.lane.b32.xlu0 %v288, 32
    %v291 = vpop.permute.xlu0 %290
    %v293 = vadd.f32 %v283, %v291
    %v294 = vtanh.pop %v293
    %296 = vrot.lane.b32.xlu0 %v294, 64
    %v297 = vpop.permute.xlu0 %296
    %v299 = vmul.f32 %v277, %v297
    %300 = vrot.lane.b32.xlu0 %v115, 96
    %v301 = vpop.permute.xlu0 %300
    %v303 = vsub.f32 %v299, %v301
    %305 = vset.pattern.permute.xlu0 0
    %306 = vperm.xlu0 %305, %v271
    %v307 = vpop.permute.xlu0 %306
    %v309 = vmul.f32 %v307, %v303
    %311 = vrot.lane.b32.xlu0 %v309, 32
    %v312 = vpop.permute.xlu0 %311
    %v314 = vadd.f32 %v115, %v312
    %v315 = vsub.f32 %v293, %v281
    %v316 = vmul.f32 %v307, %v315
    %318 = vrot.lane.b32.xlu0 %v316, 96
    %v319 = vpop.permute.xlu0 %318
    %v321 = vadd.f32 %v116, %v319
    %v322 = vmul.f32 %v307, %v299
    %s323 = scalar_lea.vmem %s93, 6
    %v324 = vld [vmem:[%s323] sm:$0x3]
    %v325 = vxor.u32 %v270, 2147483648
    %v326 = vmul.f32 %v325, 1.442695
    %v327 = vpow.pop %v326
    %v328 = vadd.f32 %v327, 1.0
    %v329 = vrcp.pop %v328
    %v330 = vmul.f32 1.0, %v329
    %v331 = vtanh.pop %v270
    %333 = vrot.lane.b32.xlu0 %v118, 32
    %v334 = vpop.permute.xlu0 %333
    %v336 = vmul.f32 %v330, %v334
    %338 = vrot.lane.b32.xlu0 %v331, 64
    %v339 = vpop.permute.xlu0 %338
    %v341 = vmul.f32 %v330, %v339
    %343 = vrot.lane.b32.xlu0 %v341, 32
    %v344 = vpop.permute.xlu0 %343
    %v346 = vadd.f32 %v336, %v344
    %v347 = vtanh.pop %v346
    %349 = vrot.lane.b32.xlu0 %v347, 64
    %v350 = vpop.permute.xlu0 %349
    %v352 = vmul.f32 %v330, %v350
    %353 = vrot.lane.b32.xlu0 %v117, 96
    %v354 = vpop.permute.xlu0 %353
    %v356 = vsub.f32 %v352, %v354
    %358 = vset.pattern.permute.xlu0 0
    %359 = vperm.xlu0 %358, %v324
    %v360 = vpop.permute.xlu0 %359
    %v362 = vmul.f32 %v360, %v356
    %364 = vrot.lane.b32.xlu0 %v362, 32
    %v365 = vpop.permute.xlu0 %364
    %v367 = vadd.f32 %v117, %v365
    %v368 = vsub.f32 %v346, %v334
    %v369 = vmul.f32 %v360, %v368
    %371 = vrot.lane.b32.xlu0 %v369, 96
    %v372 = vpop.permute.xlu0 %371
    %v374 = vadd.f32 %v118, %v372
    %v375 = vmul.f32 %v360, %v352
    %377 = vrot.lane.b32.xlu0 %v322, 32
    %v378 = vpop.permute.xlu0 %377
    %vm380 = vcmask 254976
    %381 = vst.msk [vmem:[#allocation12] sm:$0x3] %vm380, %v378
    %383 = vrot.lane.b32.xlu0 %v375, 32
    %v384 = vpop.permute.xlu0 %383
    %s386 = scalar_lea.vmem [#allocation13], 6
    %387 = vst.msk [vmem:[%s386] sm:$0x3] %vm380, %v384
    %s388 = scalar_lea.vmem [#allocation6], 2
    %v389 = vld [vmem:[%s388] sm:$0x3]
    %v391 = vsel %vm120, %v314, 0
    %393 = vmatprep.subr.mxu0 0.0
    %394 = vmatpush1.msra.mxu0 %v107
    %395 = vmatprep.subr.mxu0 0.0
    %396 = vmatpush1.msra.mxu0 %v108
    %397 = vmatprep.subr.mxu0 0.0
    %398 = vmatpush1.msra.mxu0 %v109
    %399 = vmatprep.subr.mxu0 0.0
    %400 = vmatpush1.msra.mxu0 %v110
    %401 = vmatprep.subr.mxu0 0.0
    %402 = vmatpush1.msra.mxu0 0.0
    %403 = vmatprep.subr.mxu0 0.0
    %404 = vmatpush1.msra.mxu0 0.0
    %405 = vmatprep.subr.mxu0 0.0
    %406 = vmatpush1.msra.mxu0 0.0
    %407 = vmatprep.subr.mxu0 0.0
    %408 = vmatpush1.msra.mxu0 0.0
    %409 = vmatprep.subr.mxu0 0.0
    %410 = vmatpush1.msra.mxu0 0.0
    %411 = vmatprep.subr.mxu0 0.0
    %412 = vmatpush1.msra.mxu0 0.0
    %413 = vmatprep.subr.mxu0 0.0
    %414 = vmatpush1.msra.mxu0 0.0
    %415 = vmatprep.subr.mxu0 0.0
    %416 = vmatpush1.msra.mxu0 0.0
    %417 = vmatprep.subr.mxu0 0.0
    %418 = vmatpush1.msra.mxu0 0.0
    %419 = vmatprep.subr.mxu0 0.0
    %420 = vmatpush1.msra.mxu0 0.0
    %421 = vmatprep.subr.mxu0 0.0
    %422 = vmatpush1.msra.mxu0 0.0
    %423 = vmatprep.subr.mxu0 0.0
    %424 = vmatpush1.msra.mxu0 0.0
    %425 = vmatprep.subr.mxu0 0.0
    %426 = vmatpush1.msra.mxu0 0.0
    %427 = vmatprep.subr.mxu0 0.0
    %428 = vmatpush1.msra.mxu0 0.0
    %429 = vmatprep.subr.mxu0 0.0
    %430 = vmatpush1.msra.mxu0 0.0
    %431 = vmatprep.subr.mxu0 0.0
    %432 = vmatpush1.msra.mxu0 0.0
    %433 = vmatprep.subr.mxu0 0.0
    %434 = vmatpush1.msra.mxu0 0.0
    %435 = vmatprep.subr.mxu0 0.0
    %436 = vmatpush1.msra.mxu0 0.0
    %437 = vmatprep.subr.mxu0 0.0
    %438 = vmatpush1.msra.mxu0 0.0
    %439 = vmatprep.subr.mxu0 0.0
    %440 = vmatpush1.msra.mxu0 0.0
    %441 = vmatprep.subr.mxu0 0.0
    %442 = vmatpush1.msra.mxu0 0.0
    %443 = vmatprep.subr.mxu0 0.0
    %444 = vmatpush1.msra.mxu0 0.0
    %445 = vmatprep.subr.mxu0 0.0
    %446 = vmatpush1.msra.mxu0 0.0
    %447 = vmatprep.subr.mxu0 0.0
    %448 = vmatpush1.msra.mxu0 0.0
    %449 = vmatprep.subr.mxu0 0.0
    %450 = vmatpush1.msra.mxu0 0.0
    %451 = vmatprep.subr.mxu0 0.0
    %452 = vmatpush1.msra.mxu0 0.0
    %453 = vmatprep.subr.mxu0 0.0
    %454 = vmatpush1.msra.mxu0 0.0
    %455 = vmatprep.subr.mxu0 0.0
    %456 = vmatpush1.msra.mxu0 0.0
    %457 = vmatprep.mubr.f32.mxu0 0.0
    %458 = vmatmul.mubr.f32.gmra.mrb[0].mxu0 %v391
    %v459 = vpop.f32.mrb[0].mxu0
    %v460 = vadd.f32 0.0, %v459
    %v461 = vpop.f32.mrb[0].mxu0
    %462 = vdwg.mxu0
    %v463 = vadd.f32 %v389, %v460
    %s464 = scalar_lea.vmem [#allocation9], 4
    %v465 = vld [vmem:[%s464] sm:$0x3]
    %v467 = vsel %vm120, %v367, 0
    %469 = vmatprep.subr.mxu0 0.0
    %470 = vmatpush1.msra.mxu0 %v111
    %471 = vmatprep.subr.mxu0 0.0
    %472 = vmatpush1.msra.mxu0 %v112
    %473 = vmatprep.subr.mxu0 0.0
    %474 = vmatpush1.msra.mxu0 %v113
    %475 = vmatprep.subr.mxu0 0.0
    %476 = vmatpush1.msra.mxu0 %v114
    %477 = vmatprep.subr.mxu0 0.0
    %478 = vmatpush1.msra.mxu0 0.0
    %479 = vmatprep.subr.mxu0 0.0
    %480 = vmatpush1.msra.mxu0 0.0
    %481 = vmatprep.subr.mxu0 0.0
    %482 = vmatpush1.msra.mxu0 0.0
    %483 = vmatprep.subr.mxu0 0.0
    %484 = vmatpush1.msra.mxu0 0.0
    %485 = vmatprep.subr.mxu0 0.0
    %486 = vmatpush1.msra.mxu0 0.0
    %487 = vmatprep.subr.mxu0 0.0
    %488 = vmatpush1.msra.mxu0 0.0
    %489 = vmatprep.subr.mxu0 0.0
    %490 = vmatpush1.msra.mxu0 0.0
    %491 = vmatprep.subr.mxu0 0.0
    %492 = vmatpush1.msra.mxu0 0.0
    %493 = vmatprep.subr.mxu0 0.0
    %494 = vmatpush1.msra.mxu0 0.0
    %495 = vmatprep.subr.mxu0 0.0
    %496 = vmatpush1.msra.mxu0 0.0
    %497 = vmatprep.subr.mxu0 0.0
    %498 = vmatpush1.msra.mxu0 0.0
    %499 = vmatprep.subr.mxu0 0.0
    %500 = vmatpush1.msra.mxu0 0.0
    %501 = vmatprep.subr.mxu0 0.0
    %502 = vmatpush1.msra.mxu0 0.0
    %503 = vmatprep.subr.mxu0 0.0
    %504 = vmatpush1.msra.mxu0 0.0
    %505 = vmatprep.subr.mxu0 0.0
    %506 = vmatpush1.msra.mxu0 0.0
    %507 = vmatprep.subr.mxu0 0.0
    %508 = vmatpush1.msra.mxu0 0.0
    %509 = vmatprep.subr.mxu0 0.0
    %510 = vmatpush1.msra.mxu0 0.0
    %511 = vmatprep.subr.mxu0 0.0
    %512 = vmatpush1.msra.mxu0 0.0
    %513 = vmatprep.subr.mxu0 0.0
    %514 = vmatpush1.msra.mxu0 0.0
    %515 = vmatprep.subr.mxu0 0.0
    %516 = vmatpush1.msra.mxu0 0.0
    %517 = vmatprep.subr.mxu0 0.0
    %518 = vmatpush1.msra.mxu0 0.0
    %519 = vmatprep.subr.mxu0 0.0
    %520 = vmatpush1.msra.mxu0 0.0
    %521 = vmatprep.subr.mxu0 0.0
    %522 = vmatpush1.msra.mxu0 0.0
    %523 = vmatprep.subr.mxu0 0.0
    %524 = vmatpush1.msra.mxu0 0.0
    %525 = vmatprep.subr.mxu0 0.0
    %526 = vmatpush1.msra.mxu0 0.0
    %527 = vmatprep.subr.mxu0 0.0
    %528 = vmatpush1.msra.mxu0 0.0
    %529 = vmatprep.subr.mxu0 0.0
    %530 = vmatpush1.msra.mxu0 0.0
    %531 = vmatprep.subr.mxu0 0.0
    %532 = vmatpush1.msra.mxu0 0.0
    %533 = vmatprep.mubr.f32.mxu0 0.0
    %534 = vmatmul.mubr.f32.gmra.mrb[0].mxu0 %v467
    %v535 = vpop.f32.mrb[0].mxu0
    %v536 = vadd.f32 0.0, %v535
    %v537 = vpop.f32.mrb[0].mxu0
    %538 = vdwg.mxu0
    %v539 = vadd.f32 %v465, %v536
    %s540 = scalar_lea.vmem %s2, 2
    %v541 = vld [vmem:[%s540] sm:$0x3]
    %v542 = vxor.u32 %v463, 2147483648
    %v543 = vmul.f32 %v542, 1.442695
    %v544 = vpow.pop %v543
    %v545 = vadd.f32 %v544, 1.0
    %v546 = vrcp.pop %v545
    %v547 = vmul.f32 1.0, %v546
    %v548 = vtanh.pop %v463
    %550 = vrot.lane.b32.xlu0 %v321, 32
    %v551 = vpop.permute.xlu0 %550
    %v553 = vmul.f32 %v547, %v551
    %555 = vrot.lane.b32.xlu0 %v548, 64
    %v556 = vpop.permute.xlu0 %555
    %v558 = vmul.f32 %v547, %v556
    %560 = vrot.lane.b32.xlu0 %v558, 32
    %v561 = vpop.permute.xlu0 %560
    %v563 = vadd.f32 %v553, %v561
    %v564 = vtanh.pop %v563
    %566 = vrot.lane.b32.xlu0 %v564, 64
    %v567 = vpop.permute.xlu0 %566
    %v569 = vmul.f32 %v547, %v567
    %570 = vrot.lane.b32.xlu0 %v314, 96
    %v571 = vpop.permute.xlu0 %570
    %v573 = vsub.f32 %v569, %v571
    %575 = vset.pattern.permute.xlu0 0
    %576 = vperm.xlu0 %575, %v541
    %v577 = vpop.permute.xlu0 %576
    %v579 = vmul.f32 %v577, %v573
    %581 = vrot.lane.b32.xlu0 %v579, 32
    %v582 = vpop.permute.xlu0 %581
    %v584 = vadd.f32 %v314, %v582
    %v585 = vsub.f32 %v563, %v551
    %v586 = vmul.f32 %v577, %v585
    %588 = vrot.lane.b32.xlu0 %v586, 96
    %v589 = vpop.permute.xlu0 %588
    %v591 = vadd.f32 %v321, %v589
    %v592 = vmul.f32 %v577, %v569
    %s593 = scalar_lea.vmem %s93, 4
    %v594 = vld [vmem:[%s593] sm:$0x3]
    %v595 = vxor.u32 %v539, 2147483648
    %v596 = vmul.f32 %v595, 1.442695
    %v597 = vpow.pop %v596
    %v598 = vadd.f32 %v597, 1.0
    %v599 = vrcp.pop %v598
    %v600 = vmul.f32 1.0, %v599
    %v601 = vtanh.pop %v539
    %603 = vrot.lane.b32.xlu0 %v374, 32
    %v604 = vpop.permute.xlu0 %603
    %v606 = vmul.f32 %v600, %v604
    %608 = vrot.lane.b32.xlu0 %v601, 64
    %v609 = vpop.permute.xlu0 %608
    %v611 = vmul.f32 %v600, %v609
    %613 = vrot.lane.b32.xlu0 %v611, 32
    %v614 = vpop.permute.xlu0 %613
    %v616 = vadd.f32 %v606, %v614
    %v617 = vtanh.pop %v616
    %619 = vrot.lane.b32.xlu0 %v617, 64
    %v620 = vpop.permute.xlu0 %619
    %v622 = vmul.f32 %v600, %v620
    %623 = vrot.lane.b32.xlu0 %v367, 96
    %v624 = vpop.permute.xlu0 %623
    %v626 = vsub.f32 %v622, %v624
    %628 = vset.pattern.permute.xlu0 0
    %629 = vperm.xlu0 %628, %v594
    %v630 = vpop.permute.xlu0 %629
    %v632 = vmul.f32 %v630, %v626
    %634 = vrot.lane.b32.xlu0 %v632, 32
    %v635 = vpop.permute.xlu0 %634
    %v637 = vadd.f32 %v367, %v635
    %v638 = vsub.f32 %v616, %v604
    %v639 = vmul.f32 %v630, %v638
    %641 = vrot.lane.b32.xlu0 %v639, 96
    %v642 = vpop.permute.xlu0 %641
    %v644 = vadd.f32 %v374, %v642
    %v645 = vmul.f32 %v630, %v622
    %647 = vrot.lane.b32.xlu0 %v592, 32
    %v648 = vpop.permute.xlu0 %647
    %s650 = scalar_lea.vmem [#allocation12], 2
    %651 = vst.msk [vmem:[%s650] sm:$0x3] %vm380, %v648
    %653 = vrot.lane.b32.xlu0 %v645, 32
    %v654 = vpop.permute.xlu0 %653
    %s656 = scalar_lea.vmem [#allocation13], 4
    %657 = vst.msk [vmem:[%s656] sm:$0x3] %vm380, %v654
    %s658 = scalar_lea.vmem [#allocation6], 4
    %v659 = vld [vmem:[%s658] sm:$0x3]
    %v661 = vsel %vm120, %v584, 0
    %663 = vmatprep.subr.mxu0 0.0
    %664 = vmatpush1.msra.mxu0 %v107
    %665 = vmatprep.subr.mxu0 0.0
    %666 = vmatpush1.msra.mxu0 %v108
    %667 = vmatprep.subr.mxu0 0.0
    %668 = vmatpush1.msra.mxu0 %v109
    %669 = vmatprep.subr.mxu0 0.0
    %670 = vmatpush1.msra.mxu0 %v110
    %671 = vmatprep.subr.mxu0 0.0
    %672 = vmatpush1.msra.mxu0 0.0
    %673 = vmatprep.subr.mxu0 0.0
    %674 = vmatpush1.msra.mxu0 0.0
    %675 = vmatprep.subr.mxu0 0.0
    %676 = vmatpush1.msra.mxu0 0.0
    %677 = vmatprep.subr.mxu0 0.0
    %678 = vmatpush1.msra.mxu0 0.0
    %679 = vmatprep.subr.mxu0 0.0
    %680 = vmatpush1.msra.mxu0 0.0
    %681 = vmatprep.subr.mxu0 0.0
    %682 = vmatpush1.msra.mxu0 0.0
    %683 = vmatprep.subr.mxu0 0.0
    %684 = vmatpush1.msra.mxu0 0.0
    %685 = vmatprep.subr.mxu0 0.0
    %686 = vmatpush1.msra.mxu0 0.0
    %687 = vmatprep.subr.mxu0 0.0
    %688 = vmatpush1.msra.mxu0 0.0
    %689 = vmatprep.subr.mxu0 0.0
    %690 = vmatpush1.msra.mxu0 0.0
    %691 = vmatprep.subr.mxu0 0.0
    %692 = vmatpush1.msra.mxu0 0.0
    %693 = vmatprep.subr.mxu0 0.0
    %694 = vmatpush1.msra.mxu0 0.0
    %695 = vmatprep.subr.mxu0 0.0
    %696 = vmatpush1.msra.mxu0 0.0
    %697 = vmatprep.subr.mxu0 0.0
    %698 = vmatpush1.msra.mxu0 0.0
    %699 = vmatprep.subr.mxu0 0.0
    %700 = vmatpush1.msra.mxu0 0.0
    %701 = vmatprep.subr.mxu0 0.0
    %702 = vmatpush1.msra.mxu0 0.0
    %703 = vmatprep.subr.mxu0 0.0
    %704 = vmatpush1.msra.mxu0 0.0
    %705 = vmatprep.subr.mxu0 0.0
    %706 = vmatpush1.msra.mxu0 0.0
    %707 = vmatprep.subr.mxu0 0.0
    %708 = vmatpush1.msra.mxu0 0.0
    %709 = vmatprep.subr.mxu0 0.0
    %710 = vmatpush1.msra.mxu0 0.0
    %711 = vmatprep.subr.mxu0 0.0
    %712 = vmatpush1.msra.mxu0 0.0
    %713 = vmatprep.subr.mxu0 0.0
    %714 = vmatpush1.msra.mxu0 0.0
    %715 = vmatprep.subr.mxu0 0.0
    %716 = vmatpush1.msra.mxu0 0.0
    %717 = vmatprep.subr.mxu0 0.0
    %718 = vmatpush1.msra.mxu0 0.0
    %719 = vmatprep.subr.mxu0 0.0
    %720 = vmatpush1.msra.mxu0 0.0
    %721 = vmatprep.subr.mxu0 0.0
    %722 = vmatpush1.msra.mxu0 0.0
    %723 = vmatprep.subr.mxu0 0.0
    %724 = vmatpush1.msra.mxu0 0.0
    %725 = vmatprep.subr.mxu0 0.0
    %726 = vmatpush1.msra.mxu0 0.0
    %727 = vmatprep.mubr.f32.mxu0 0.0
    %728 = vmatmul.mubr.f32.gmra.mrb[0].mxu0 %v661
    %v729 = vpop.f32.mrb[0].mxu0
    %v730 = vadd.f32 0.0, %v729
    %v731 = vpop.f32.mrb[0].mxu0
    %732 = vdwg.mxu0
    %v733 = vadd.f32 %v659, %v730
    %s734 = scalar_lea.vmem [#allocation9], 2
    %v735 = vld [vmem:[%s734] sm:$0x3]
    %v737 = vsel %vm120, %v637, 0
    %739 = vmatprep.subr.mxu0 0.0
    %740 = vmatpush1.msra.mxu0 %v111
    %741 = vmatprep.subr.mxu0 0.0
    %742 = vmatpush1.msra.mxu0 %v112
    %743 = vmatprep.subr.mxu0 0.0
    %744 = vmatpush1.msra.mxu0 %v113
    %745 = vmatprep.subr.mxu0 0.0
    %746 = vmatpush1.msra.mxu0 %v114
    %747 = vmatprep.subr.mxu0 0.0
    %748 = vmatpush1.msra.mxu0 0.0
    %749 = vmatprep.subr.mxu0 0.0
    %750 = vmatpush1.msra.mxu0 0.0
    %751 = vmatprep.subr.mxu0 0.0
    %752 = vmatpush1.msra.mxu0 0.0
    %753 = vmatprep.subr.mxu0 0.0
    %754 = vmatpush1.msra.mxu0 0.0
    %755 = vmatprep.subr.mxu0 0.0
    %756 = vmatpush1.msra.mxu0 0.0
    %757 = vmatprep.subr.mxu0 0.0
    %758 = vmatpush1.msra.mxu0 0.0
    %759 = vmatprep.subr.mxu0 0.0
    %760 = vmatpush1.msra.mxu0 0.0
    %761 = vmatprep.subr.mxu0 0.0
    %762 = vmatpush1.msra.mxu0 0.0
    %763 = vmatprep.subr.mxu0 0.0
    %764 = vmatpush1.msra.mxu0 0.0
    %765 = vmatprep.subr.mxu0 0.0
    %766 = vmatpush1.msra.mxu0 0.0
    %767 = vmatprep.subr.mxu0 0.0
    %768 = vmatpush1.msra.mxu0 0.0
    %769 = vmatprep.subr.mxu0 0.0
    %770 = vmatpush1.msra.mxu0 0.0
    %771 = vmatprep.subr.mxu0 0.0
    %772 = vmatpush1.msra.mxu0 0.0
    %773 = vmatprep.subr.mxu0 0.0
    %774 = vmatpush1.msra.mxu0 0.0
    %775 = vmatprep.subr.mxu0 0.0
    %776 = vmatpush1.msra.mxu0 0.0
    %777 = vmatprep.subr.mxu0 0.0
    %778 = vmatpush1.msra.mxu0 0.0
    %779 = vmatprep.subr.mxu0 0.0
    %780 = vmatpush1.msra.mxu0 0.0
    %781 = vmatprep.subr.mxu0 0.0
    %782 = vmatpush1.msra.mxu0 0.0
    %783 = vmatprep.subr.mxu0 0.0
    %784 = vmatpush1.msra.mxu0 0.0
    %785 = vmatprep.subr.mxu0 0.0
    %786 = vmatpush1.msra.mxu0 0.0
    %787 = vmatprep.subr.mxu0 0.0
    %788 = vmatpush1.msra.mxu0 0.0
    %789 = vmatprep.subr.mxu0 0.0
    %790 = vmatpush1.msra.mxu0 0.0
    %791 = vmatprep.subr.mxu0 0.0
    %792 = vmatpush1.msra.mxu0 0.0
    %793 = vmatprep.subr.mxu0 0.0
    %794 = vmatpush1.msra.mxu0 0.0
    %795 = vmatprep.subr.mxu0 0.0
    %796 = vmatpush1.msra.mxu0 0.0
    %797 = vmatprep.subr.mxu0 0.0
    %798 = vmatpush1.msra.mxu0 0.0
    %799 = vmatprep.subr.mxu0 0.0
    %800 = vmatpush1.msra.mxu0 0.0
    %801 = vmatprep.subr.mxu0 0.0
    %802 = vmatpush1.msra.mxu0 0.0
    %803 = vmatprep.mubr.f32.mxu0 0.0
    %804 = vmatmul.mubr.f32.gmra.mrb[0].mxu0 %v737
    %v805 = vpop.f32.mrb[0].mxu0
    %v806 = vadd.f32 0.0, %v805
    %v807 = vpop.f32.mrb[0].mxu0
    %808 = vdwg.mxu0
    %v809 = vadd.f32 %v735, %v806
    %s810 = scalar_lea.vmem %s2, 4
    %v811 = vld [vmem:[%s810] sm:$0x3]
    %v812 = vxor.u32 %v733, 2147483648
    %v813 = vmul.f32 %v812, 1.442695
    %v814 = vpow.pop %v813
    %v815 = vadd.f32 %v814, 1.0
    %v816 = vrcp.pop %v815
    %v817 = vmul.f32 1.0, %v816
    %v818 = vtanh.pop %v733
    %820 = vrot.lane.b32.xlu0 %v591, 32
    %v821 = vpop.permute.xlu0 %820
    %v823 = vmul.f32 %v817, %v821
    %825 = vrot.lane.b32.xlu0 %v818, 64
    %v826 = vpop.permute.xlu0 %825
    %v828 = vmul.f32 %v817, %v826
    %830 = vrot.lane.b32.xlu0 %v828, 32
    %v831 = vpop.permute.xlu0 %830
    %v833 = vadd.f32 %v823, %v831
    %v834 = vtanh.pop %v833
    %836 = vrot.lane.b32.xlu0 %v834, 64
    %v837 = vpop.permute.xlu0 %836
    %v839 = vmul.f32 %v817, %v837
    %840 = vrot.lane.b32.xlu0 %v584, 96
    %v841 = vpop.permute.xlu0 %840
    %v843 = vsub.f32 %v839, %v841
    %845 = vset.pattern.permute.xlu0 0
    %846 = vperm.xlu0 %845, %v811
    %v847 = vpop.permute.xlu0 %846
    %v849 = vmul.f32 %v847, %v843
    %851 = vrot.lane.b32.xlu0 %v849, 32
    %v852 = vpop.permute.xlu0 %851
    %v854 = vadd.f32 %v584, %v852
    %v855 = vsub.f32 %v833, %v821
    %v856 = vmul.f32 %v847, %v855
    %858 = vrot.lane.b32.xlu0 %v856, 96
    %v859 = vpop.permute.xlu0 %858
    %v861 = vadd.f32 %v591, %v859
    %v862 = vmul.f32 %v847, %v839
    %s863 = scalar_lea.vmem %s93, 2
    %v864 = vld [vmem:[%s863] sm:$0x3]
    %v865 = vxor.u32 %v809, 2147483648
    %v866 = vmul.f32 %v865, 1.442695
    %v867 = vpow.pop %v866
    %v868 = vadd.f32 %v867, 1.0
    %v869 = vrcp.pop %v868
    %v870 = vmul.f32 1.0, %v869
    %v871 = vtanh.pop %v809
    %873 = vrot.lane.b32.xlu0 %v644, 32
    %v874 = vpop.permute.xlu0 %873
    %v876 = vmul.f32 %v870, %v874
    %878 = vrot.lane.b32.xlu0 %v871, 64
    %v879 = vpop.permute.xlu0 %878
    %v881 = vmul.f32 %v870, %v879
    %883 = vrot.lane.b32.xlu0 %v881, 32
    %v884 = vpop.permute.xlu0 %883
    %v886 = vadd.f32 %v876, %v884
    %v887 = vtanh.pop %v886
    %889 = vrot.lane.b32.xlu0 %v887, 64
    %v890 = vpop.permute.xlu0 %889
    %v892 = vmul.f32 %v870, %v890
    %893 = vrot.lane.b32.xlu0 %v637, 96
    %v894 = vpop.permute.xlu0 %893
    %v896 = vsub.f32 %v892, %v894
    %898 = vset.pattern.permute.xlu0 0
    %899 = vperm.xlu0 %898, %v864
    %v900 = vpop.permute.xlu0 %899
    %v902 = vmul.f32 %v900, %v896
    %904 = vrot.lane.b32.xlu0 %v902, 32
    %v905 = vpop.permute.xlu0 %904
    %v907 = vadd.f32 %v637, %v905
    %v908 = vsub.f32 %v886, %v874
    %v909 = vmul.f32 %v900, %v908
    %911 = vrot.lane.b32.xlu0 %v909, 96
    %v912 = vpop.permute.xlu0 %911
    %v914 = vadd.f32 %v644, %v912
    %v915 = vmul.f32 %v900, %v892
    %917 = vrot.lane.b32.xlu0 %v862, 32
    %v918 = vpop.permute.xlu0 %917
    %s920 = scalar_lea.vmem [#allocation12], 4
    %921 = vst.msk [vmem:[%s920] sm:$0x3] %vm380, %v918
    %923 = vrot.lane.b32.xlu0 %v915, 32
    %v924 = vpop.permute.xlu0 %923
    %s926 = scalar_lea.vmem [#allocation13], 2
    %927 = vst.msk [vmem:[%s926] sm:$0x3] %vm380, %v924
    %s928 = scalar_lea.vmem [#allocation6], 6
    %v929 = vld [vmem:[%s928] sm:$0x3]
    %v931 = vsel %vm120, %v854, 0
    %933 = vmatprep.subr.mxu0 0.0
    %934 = vmatpush1.msra.mxu0 %v107
    %935 = vmatprep.subr.mxu0 0.0
    %936 = vmatpush1.msra.mxu0 %v108
    %937 = vmatprep.subr.mxu0 0.0
    %938 = vmatpush1.msra.mxu0 %v109
    %939 = vmatprep.subr.mxu0 0.0
    %940 = vmatpush1.msra.mxu0 %v110
    %941 = vmatprep.subr.mxu0 0.0
    %942 = vmatpush1.msra.mxu0 0.0
    %943 = vmatprep.subr.mxu0 0.0
    %944 = vmatpush1.msra.mxu0 0.0
    %945 = vmatprep.subr.mxu0 0.0
    %946 = vmatpush1.msra.mxu0 0.0
    %947 = vmatprep.subr.mxu0 0.0
    %948 = vmatpush1.msra.mxu0 0.0
    %949 = vmatprep.subr.mxu0 0.0
    %950 = vmatpush1.msra.mxu0 0.0
    %951 = vmatprep.subr.mxu0 0.0
    %952 = vmatpush1.msra.mxu0 0.0
    %953 = vmatprep.subr.mxu0 0.0
    %954 = vmatpush1.msra.mxu0 0.0
    %955 = vmatprep.subr.mxu0 0.0
    %956 = vmatpush1.msra.mxu0 0.0
    %957 = vmatprep.subr.mxu0 0.0
    %958 = vmatpush1.msra.mxu0 0.0
    %959 = vmatprep.subr.mxu0 0.0
    %960 = vmatpush1.msra.mxu0 0.0
    %961 = vmatprep.subr.mxu0 0.0
    %962 = vmatpush1.msra.mxu0 0.0
    %963 = vmatprep.subr.mxu0 0.0
    %964 = vmatpush1.msra.mxu0 0.0
    %965 = vmatprep.subr.mxu0 0.0
    %966 = vmatpush1.msra.mxu0 0.0
    %967 = vmatprep.subr.mxu0 0.0
    %968 = vmatpush1.msra.mxu0 0.0
    %969 = vmatprep.subr.mxu0 0.0
    %970 = vmatpush1.msra.mxu0 0.0
    %971 = vmatprep.subr.mxu0 0.0
    %972 = vmatpush1.msra.mxu0 0.0
    %973 = vmatprep.subr.mxu0 0.0
    %974 = vmatpush1.msra.mxu0 0.0
    %975 = vmatprep.subr.mxu0 0.0
    %976 = vmatpush1.msra.mxu0 0.0
    %977 = vmatprep.subr.mxu0 0.0
    %978 = vmatpush1.msra.mxu0 0.0
    %979 = vmatprep.subr.mxu0 0.0
    %980 = vmatpush1.msra.mxu0 0.0
    %981 = vmatprep.subr.mxu0 0.0
    %982 = vmatpush1.msra.mxu0 0.0
    %983 = vmatprep.subr.mxu0 0.0
    %984 = vmatpush1.msra.mxu0 0.0
    %985 = vmatprep.subr.mxu0 0.0
    %986 = vmatpush1.msra.mxu0 0.0
    %987 = vmatprep.subr.mxu0 0.0
    %988 = vmatpush1.msra.mxu0 0.0
    %989 = vmatprep.subr.mxu0 0.0
    %990 = vmatpush1.msra.mxu0 0.0
    %991 = vmatprep.subr.mxu0 0.0
    %992 = vmatpush1.msra.mxu0 0.0
    %993 = vmatprep.subr.mxu0 0.0
    %994 = vmatpush1.msra.mxu0 0.0
    %995 = vmatprep.subr.mxu0 0.0
    %996 = vmatpush1.msra.mxu0 0.0
    %997 = vmatprep.mubr.f32.mxu0 0.0
    %998 = vmatmul.mubr.f32.gmra.mrb[0].mxu0 %v931
    %v999 = vpop.f32.mrb[0].mxu0
    %v1000 = vadd.f32 0.0, %v999
    %v1001 = vpop.f32.mrb[0].mxu0
    %1002 = vdwg.mxu0
    %v1003 = vadd.f32 %v929, %v1000
    %v1004 = vld [vmem:[#allocation9] sm:$0x3]
    %v1006 = vsel %vm120, %v907, 0
    %1008 = vmatprep.subr.mxu0 0.0
    %1009 = vmatpush1.msra.mxu0 %v111
    %1010 = vmatprep.subr.mxu0 0.0
    %1011 = vmatpush1.msra.mxu0 %v112
    %1012 = vmatprep.subr.mxu0 0.0
    %1013 = vmatpush1.msra.mxu0 %v113
    %1014 = vmatprep.subr.mxu0 0.0
    %1015 = vmatpush1.msra.mxu0 %v114
    %1016 = vmatprep.subr.mxu0 0.0
    %1017 = vmatpush1.msra.mxu0 0.0
    %1018 = vmatprep.subr.mxu0 0.0
    %1019 = vmatpush1.msra.mxu0 0.0
    %1020 = vmatprep.subr.mxu0 0.0
    %1021 = vmatpush1.msra.mxu0 0.0
    %1022 = vmatprep.subr.mxu0 0.0
    %1023 = vmatpush1.msra.mxu0 0.0
    %1024 = vmatprep.subr.mxu0 0.0
    %1025 = vmatpush1.msra.mxu0 0.0
    %1026 = vmatprep.subr.mxu0 0.0
    %1027 = vmatpush1.msra.mxu0 0.0
    %1028 = vmatprep.subr.mxu0 0.0
    %1029 = vmatpush1.msra.mxu0 0.0
    %1030 = vmatprep.subr.mxu0 0.0
    %1031 = vmatpush1.msra.mxu0 0.0
    %1032 = vmatprep.subr.mxu0 0.0
    %1033 = vmatpush1.msra.mxu0 0.0
    %1034 = vmatprep.subr.mxu0 0.0
    %1035 = vmatpush1.msra.mxu0 0.0
    %1036 = vmatprep.subr.mxu0 0.0
    %1037 = vmatpush1.msra.mxu0 0.0
    %1038 = vmatprep.subr.mxu0 0.0
    %1039 = vmatpush1.msra.mxu0 0.0
    %1040 = vmatprep.subr.mxu0 0.0
    %1041 = vmatpush1.msra.mxu0 0.0
    %1042 = vmatprep.subr.mxu0 0.0
    %1043 = vmatpush1.msra.mxu0 0.0
    %1044 = vmatprep.subr.mxu0 0.0
    %1045 = vmatpush1.msra.mxu0 0.0
    %1046 = vmatprep.subr.mxu0 0.0
    %1047 = vmatpush1.msra.mxu0 0.0
    %1048 = vmatprep.subr.mxu0 0.0
    %1049 = vmatpush1.msra.mxu0 0.0
    %1050 = vmatprep.subr.mxu0 0.0
    %1051 = vmatpush1.msra.mxu0 0.0
    %1052 = vmatprep.subr.mxu0 0.0
    %1053 = vmatpush1.msra.mxu0 0.0
    %1054 = vmatprep.subr.mxu0 0.0
    %1055 = vmatpush1.msra.mxu0 0.0
    %1056 = vmatprep.subr.mxu0 0.0
    %1057 = vmatpush1.msra.mxu0 0.0
    %1058 = vmatprep.subr.mxu0 0.0
    %1059 = vmatpush1.msra.mxu0 0.0
    %1060 = vmatprep.subr.mxu0 0.0
    %1061 = vmatpush1.msra.mxu0 0.0
    %1062 = vmatprep.subr.mxu0 0.0
    %1063 = vmatpush1.msra.mxu0 0.0
    %1064 = vmatprep.subr.mxu0 0.0
    %1065 = vmatpush1.msra.mxu0 0.0
    %1066 = vmatprep.subr.mxu0 0.0
    %1067 = vmatpush1.msra.mxu0 0.0
    %1068 = vmatprep.subr.mxu0 0.0
    %1069 = vmatpush1.msra.mxu0 0.0
    %1070 = vmatprep.subr.mxu0 0.0
    %1071 = vmatpush1.msra.mxu0 0.0
    %1072 = vmatprep.mubr.f32.mxu0 0.0
    %1073 = vmatmul.mubr.f32.gmra.mrb[0].mxu0 %v1006
    %v1074 = vpop.f32.mrb[0].mxu0
    %v1075 = vadd.f32 0.0, %v1074
    %v1076 = vpop.f32.mrb[0].mxu0
    %1077 = vdwg.mxu0
    %v1078 = vadd.f32 %v1004, %v1075
    %s1079 = scalar_lea.vmem %s2, 6
    %v1080 = vld [vmem:[%s1079] sm:$0x3]
    %v1081 = vxor.u32 %v1003, 2147483648
    %v1082 = vmul.f32 %v1081, 1.442695
    %v1083 = vpow.pop %v1082
    %v1084 = vadd.f32 %v1083, 1.0
    %v1085 = vrcp.pop %v1084
    %v1086 = vmul.f32 1.0, %v1085
    %v1087 = vtanh.pop %v1003
    %1089 = vrot.lane.b32.xlu0 %v861, 32
    %v1090 = vpop.permute.xlu0 %1089
    %v1092 = vmul.f32 %v1086, %v1090
    %1094 = vrot.lane.b32.xlu0 %v1087, 64
    %v1095 = vpop.permute.xlu0 %1094
    %v1097 = vmul.f32 %v1086, %v1095
    %1099 = vrot.lane.b32.xlu0 %v1097, 32
    %v1100 = vpop.permute.xlu0 %1099
    %v1102 = vadd.f32 %v1092, %v1100
    %v1103 = vtanh.pop %v1102
    %1105 = vrot.lane.b32.xlu0 %v1103, 64
    %v1106 = vpop.permute.xlu0 %1105
    %v1108 = vmul.f32 %v1086, %v1106
    %1109 = vrot.lane.b32.xlu0 %v854, 96
    %v1110 = vpop.permute.xlu0 %1109
    %v1112 = vsub.f32 %v1108, %v1110
    %1114 = vset.pattern.permute.xlu0 0
    %1115 = vperm.xlu0 %1114, %v1080
    %v1116 = vpop.permute.xlu0 %1115
    %v1118 = vmul.f32 %v1116, %v1112
    %1120 = vrot.lane.b32.xlu0 %v1118, 32
    %v1121 = vpop.permute.xlu0 %1120
    %v1123 = vadd.f32 %v854, %v1121
    %v1124 = vsub.f32 %v1102, %v1090
    %v1125 = vmul.f32 %v1116, %v1124
    %1127 = vrot.lane.b32.xlu0 %v1125, 96
    %v1128 = vpop.permute.xlu0 %1127
    %v1130 = vadd.f32 %v861, %v1128
    %v1131 = vmul.f32 %v1116, %v1108
    %v1132 = vld [vmem:[%s93] sm:$0x3]
    %v1133 = vxor.u32 %v1078, 2147483648
    %v1134 = vmul.f32 %v1133, 1.442695
    %v1135 = vpow.pop %v1134
    %v1136 = vadd.f32 %v1135, 1.0
    %v1137 = vrcp.pop %v1136
    %v1138 = vmul.f32 1.0, %v1137
    %v1139 = vtanh.pop %v1078
    %1141 = vrot.lane.b32.xlu0 %v914, 32
    %v1142 = vpop.permute.xlu0 %1141
    %v1144 = vmul.f32 %v1138, %v1142
    %1146 = vrot.lane.b32.xlu0 %v1139, 64
    %v1147 = vpop.permute.xlu0 %1146
    %v1149 = vmul.f32 %v1138, %v1147
    %1151 = vrot.lane.b32.xlu0 %v1149, 32
    %v1152 = vpop.permute.xlu0 %1151
    %v1154 = vadd.f32 %v1144, %v1152
    %v1155 = vtanh.pop %v1154
    %1157 = vrot.lane.b32.xlu0 %v1155, 64
    %v1158 = vpop.permute.xlu0 %1157
    %v1160 = vmul.f32 %v1138, %v1158
    %1161 = vrot.lane.b32.xlu0 %v907, 96
    %v1162 = vpop.permute.xlu0 %1161
    %v1164 = vsub.f32 %v1160, %v1162
    %1166 = vset.pattern.permute.xlu0 0
    %1167 = vperm.xlu0 %1166, %v1132
    %v1168 = vpop.permute.xlu0 %1167
    %v1170 = vmul.f32 %v1168, %v1164
    %1172 = vrot.lane.b32.xlu0 %v1170, 32
    %v1173 = vpop.permute.xlu0 %1172
    %v1175 = vadd.f32 %v907, %v1173
    %v1176 = vsub.f32 %v1154, %v1142
    %v1177 = vmul.f32 %v1168, %v1176
    %1179 = vrot.lane.b32.xlu0 %v1177, 96
    %v1180 = vpop.permute.xlu0 %1179
    %v1182 = vadd.f32 %v914, %v1180
    %v1183 = vmul.f32 %v1168, %v1160
    %1185 = vrot.lane.b32.xlu0 %v1131, 32
    %v1186 = vpop.permute.xlu0 %1185
    %s1188 = scalar_lea.vmem [#allocation12], 6
    %1189 = vst.msk [vmem:[%s1188] sm:$0x3] %vm380, %v1186
    %1191 = vrot.lane.b32.xlu0 %v1183, 32
    %v1192 = vpop.permute.xlu0 %1191
    %1194 = vst.msk [vmem:[#allocation13] sm:$0x3] %vm380, %v1192
    %1195 = vst.msk [vmem:[#allocation2] sm:$0x3] %vm380, %v1123
    %1196 = vst.msk [vmem:[#allocation3] sm:$0x3] %vm380, %v1130
    %1197 = vst.msk [vmem:[#allocation4] sm:$0x3] %vm380, %v1175
    %1198 = vst.msk [vmem:[#allocation5] sm:$0x3] %vm380, %v1182
    // Predicated region
    $region42: #{tpu_custom_call.1} parent=1 // pred_check
      _
    $region43: #{tpu_custom_call.1} parent=1 // pred_check_branch
      %1200 = sbr.rel (0) target = $region45
    $region44: #{tpu_custom_call.1} parent=1 // pred_region
      %s1202 = ssub.s32 128, 128
      %1203 = vsyncadd [#allocation8], %s1202
      %s1204 = sshll.u32 [#allocation12], 4
      %s1205 = int_to_ptr.vmem [resolvable:$true] %s1204
      %1210 = dma.vmem_to_hbm [thread:$0]  %s1205, 128, %s6, [#allocation8], 32, 32, 2
    $region45: #{tpu_custom_call.1} parent=1 // pred_fallthru
      _
    // Predicated region
    $region46: #{tpu_custom_call.1} parent=1 // pred_check
      _
    $region47: #{tpu_custom_call.1} parent=1 // pred_check_branch
      %1212 = sbr.rel (0) target = $region49
    $region48: #{tpu_custom_call.1} parent=1 // pred_region
      %s1213 = ssub.s32 0, 0
      %s1214 = smul.u32 4, %s1213
      %s1216 = ssub.s32 128, 128
      %1217 = vsyncadd [#allocation14], %s1216
      %s1218 = smul.addr %s1214, 32
      %s1219 = scalar_lea.hbm %s7, %s1218
      %s1220 = sshll.u32 [#allocation13], 4
      %s1221 = int_to_ptr.vmem [resolvable:$true] %s1220
      %1226 = dma.vmem_to_hbm [thread:$0]  %s1221, 128, %s1219, [#allocation14], 32, 32, 2
    $region49: #{tpu_custom_call.1} parent=1 // pred_fallthru
      _
    // Predicated region
    $region50: #{tpu_custom_call.1} parent=1 // pred_check
      _
    $region51: #{tpu_custom_call.1} parent=1 // pred_check_branch
      %1228 = sbr.rel (0) target = $region53
    $region52: #{tpu_custom_call.1} parent=1 // pred_region
      %1229 = dma.done [#allocation8], 128
    $region53: #{tpu_custom_call.1} parent=1 // pred_fallthru
      _
    // Predicated region
    $region54: #{tpu_custom_call.1} parent=1 // pred_check
      _
    $region55: #{tpu_custom_call.1} parent=1 // pred_check_branch
      %1231 = sbr.rel (0) target = $region57
    $region56: #{tpu_custom_call.1} parent=1 // pred_region
      %1232 = dma.done [#allocation14], 128
    $region57: #{tpu_custom_call.1} parent=1 // pred_fallthru
      _
    %1233 = vsyncpa [#allocation7], 1
    %1234 = vsyncpa [#allocation10], 1
    %1235 = vsyncpa [#allocation8], 1
    %1236 = vsyncpa [#allocation14], 1

</llo_original>
